<compile_context>
chip_gen: v5e
topology: v5e:2x2
jax: 0.10.0
libtpu: 0.0.40
codegen_flags: <defaults>
</compile_context>

<pallas_src>
import functools

import jax
import jax.numpy as jnp
from jax import lax
from jax.experimental import pallas as pl
from jax.experimental.pallas import tpu as pltpu


# ------------------------------ Pallas kernel -------------------------------

def _basic_block_kernel(x_ref, w1_ref, s1_ref, w2_ref, s2_ref, o_ref,
                        pad_ref, pat_ref, *, H, W, Bt, compute_dtype):
    # x_ref  : (Bt, C, H*W)        images, flattened spatial on lanes
    # w1/w2  : (C, 9*C)            conv weights * BN scale, K = (ky*3+kx)*C+ci,
    #                              already in compute_dtype (bf16 by default)
    # s1/s2  : (C, 1) f32          folded BN shift (beta - scale*running_mean)
    # o_ref  : (Bt, C, H*W)
    # pad_ref: (C, (H+2)*W + 2) f32  row-padded single-image scratch: one zero
    #          row above/below the image plus one guard lane at each end, so
    #          every 3x3 tap slab is an in-bounds static lane slice.
    # pat_ref: (9*C, Bt*H*W)       im2col scratch, images stacked along lanes.
    C = x_ref.shape[1]
    HW = H * W
    x_off = W + 1                         # start of the image inside pad_ref
    padl = (H + 2) * W + 2

    # Zero ONLY the border of the padded scratch (top/bottom rows + guard
    # lanes); the image region is fully overwritten before every read.
    pad_ref[:, :x_off] = jnp.zeros((C, x_off), jnp.float32)
    pad_ref[:, x_off + HW:] = jnp.zeros((C, padl - x_off - HW), jnp.float32)

    # Wrap-around masks for the dx = -1 / +1 taps.  Hoisted: reused by both
    # convs and all Bt images.
    col = lax.broadcasted_iota(jnp.int32, (C, HW), 1) % W
    left_ok = col > 0                     # valid source for dx = -1 taps
    right_ok = col < W - 1                # valid source for dx = +1 taps

    pat_dtype = pat_ref.dtype

    def build_patches(get_image):
        # Fill pat_ref with the im2col of all Bt images:
        # rows  (ky*3+kx)*C + ci , columns  b*HW + flat_spatial.
        for b in range(Bt):
            pad_ref[:, x_off:x_off + HW] = get_image(b)       # (C, HW) f32
            for ky in range(3):                               # dy = ky - 1
                for kx in range(3):                           # dx = kx - 1
                    off = ky * W + kx                         # static lane off
                    slab = pad_ref[:, off:off + HW]           # (C, HW)
                    if kx == 0:        # dx = -1: mask j == 0 wrap-around
                        slab = jnp.where(left_ok, slab, 0.0)
                    elif kx == 2:      # dx = +1: mask j == W-1 wrap-around
                        slab = jnp.where(right_ok, slab, 0.0)
                    t = ky * 3 + kx
                    pat_ref[t * C:(t + 1) * C,
                            b * HW:(b + 1) * HW] = slab.astype(pat_dtype)

    def matmul_bn(w_ref, s_ref):
        # Single MXU matmul per conv: (C, 9C) @ (9C, Bt*HW), f32 accumulate.
        acc = jnp.dot(w_ref[...],
                      pat_ref[...].astype(compute_dtype),
                      preferred_element_type=jnp.float32)     # (C, Bt*HW) f32
        return acc + s_ref[...]                               # (C,1) broadcast

    # conv1 + bn1 + relu
    build_patches(lambda b: x_ref[b].astype(jnp.float32))
    h = jnp.maximum(matmul_bn(w1_ref, s1_ref), 0.0)           # (C, Bt*HW) f32

    # conv2 + bn2
    build_patches(lambda b: h[:, b * HW:(b + 1) * HW])
    out = matmul_bn(w2_ref, s2_ref)                           # (C, Bt*HW) f32

    # residual add + final relu, stored lane-dense per image (f32 epilogue).
    for b in range(Bt):
        res = out[:, b * HW:(b + 1) * HW] + x_ref[b].astype(jnp.float32)
        o_ref[b] = jnp.maximum(res, 0.0).astype(o_ref.dtype)


# -------------------------------- wrapper ------------------------------------

def _fold_conv_bn(w_oihw, bn, compute_dtype):
    """Fold eval-mode BN (scale, shift) into a bias-free 3x3 conv weight."""
    gamma, beta, mean, var, eps = bn
    cout, cin = w_oihw.shape[0], w_oihw.shape[1]
    scale = gamma / jnp.sqrt(var + eps)                       # (Cout,)
    # (Cout, Cin, 3, 3) -> (Cout, 3, 3, Cin) -> (Cout, 9*Cin),
    # so K index = (ky*3 + kx)*Cin + ci, matching the kernel's slab order.
    w_k = jnp.transpose(w_oihw, (0, 2, 3, 1)).reshape(cout, 9 * cin)
    w_folded = (w_k * scale[:, None]).astype(compute_dtype)   # pre-cast for MXU
    shift = (beta - scale * mean).reshape(cout, 1).astype(jnp.float32)
    return w_folded, shift


def _pick_batch_tile(B, HW, target_lanes=512):
    """Largest divisor of B with Bt*HW not far past ~target_lanes lanes."""
    want = max(1, -(-target_lanes // HW))        # ceil(target / HW)
    bt = 1
    for d in range(1, B + 1):
        if B % d == 0 and d <= want:
            bt = d
    return bt


def basic_block_forward(params, x, *, compute_dtype=jnp.bfloat16,
                        batch_tile=None):
    """BasicBlock.forward (stride=1, downsample=None, eval-mode BN), NCHW."""
    B, C, H, W = x.shape
    HW = H * W
    # Lane-dense layout assumptions (review correctness concern): spatial size
    # must fill whole lanes and channels whole f32 sublanes.
    assert HW % 128 == 0, f"H*W={HW} must be a multiple of 128 for this layout"
    assert C % 8 == 0, f"C={C} must be a multiple of 8 for this layout"

    if batch_tile is None:
        batch_tile = _pick_batch_tile(B, HW)
    Bt = batch_tile
    assert B % Bt == 0, (B, Bt)

    # im2col scratch in bf16 only when the per-tap row blocks are aligned to
    # the bf16 (16, 128) sublane packing; otherwise keep it f32 and cast the
    # matmul operand (the review's small-C caveat).
    if C % 16 == 0 and jnp.dtype(compute_dtype).itemsize == 2:
        pat_dtype = compute_dtype
    else:
        pat_dtype = jnp.float32

    w1, s1 = _fold_conv_bn(params["w1"], params["bn1"], compute_dtype)
    w2, s2 = _fold_conv_bn(params["w2"], params["bn2"], compute_dtype)

    kernel = functools.partial(_basic_block_kernel, H=H, W=W, Bt=Bt,
                               compute_dtype=compute_dtype)

    # VMEM footprint per step (test config): x/out blocks 2*16 KiB each
    # (double-buffered), pad 9 KiB, pat 144 KiB -> far under the 32 MiB scoped
    # default on all generations, so no explicit vmem_limit_bytes needed here.
    # At real ResNet sizes, budget 9*C*Bt*HW*itemsize for pat and set
    # vmem_limit_bytes (v7x: 64 MiB physical / 32 MiB scoped default).
    out = pl.pallas_call(
        kernel,
        out_shape=jax.ShapeDtypeStruct((B, C, HW), x.dtype),
        grid=(B // Bt,),
        in_specs=[
            pl.BlockSpec((Bt, C, HW), lambda g: (g, 0, 0)),    # x (lane-dense)
            pl.BlockSpec((C, 9 * C), lambda g: (0, 0)),        # w1 (folded)
            pl.BlockSpec((C, 1), lambda g: (0, 0)),            # shift1
            pl.BlockSpec((C, 9 * C), lambda g: (0, 0)),        # w2 (folded)
            pl.BlockSpec((C, 1), lambda g: (0, 0)),            # shift2
        ],
        out_specs=pl.BlockSpec((Bt, C, HW), lambda g: (g, 0, 0)),
        scratch_shapes=[
            pltpu.VMEM((C, (H + 2) * W + 2), jnp.float32),     # padded image
            pltpu.VMEM((9 * C, Bt * HW), pat_dtype),           # im2col
        ],
        compiler_params=pltpu.CompilerParams(dimension_semantics=("parallel",)),
    )(x.reshape(B, C, HW), w1, s1, w2, s2)

    return out.reshape(B, C, H, W)


# --------------------------- pure-JAX reference ------------------------------

def _ref_forward(params, x):
    def conv(v, w):
        return lax.conv_general_dilated(
            v, w, (1, 1), ((1, 1), (1, 1)),
            dimension_numbers=("NCHW", "OIHW", "NCHW"))

    def bn(v, p):
        gamma, beta, mean, var, eps = p
        v = (v - mean[None, :, None, None]) / jnp.sqrt(var + eps)[None, :, None, None]
        return v * gamma[None, :, None, None] + beta[None, :, None, None]

    out = jnp.maximum(bn(conv(x, params["w1"]), params["bn1"]), 0.0)
    out = bn(conv(out, params["w2"]), params["bn2"])
    out = out + x
    return jnp.maximum(out, 0.0)


# ----------------------------------- main ------------------------------------

if __name__ == "__main__":
    # BasicBlock(inplanes=8, planes=8): stride=1 / downsample=None requires
    # inplanes == planes so the residual add is shape-compatible.
    B, C, H, W = 2, 8, 16, 16
    eps = 1e-5

    key = jax.random.PRNGKey(0)
    ks = jax.random.split(key, 11)

    def bn_params(k0, k1, k2, k3):
        return (1.0 + 0.1 * jax.random.normal(k0, (C,), jnp.float32),   # gamma
                0.1 * jax.random.normal(k1, (C,), jnp.float32),         # beta
                0.1 * jax.random.normal(k2, (C,), jnp.float32),         # running_mean
                0.5 + jax.random.uniform(k3, (C,), jnp.float32),        # running_var
                eps)

    params = {
        "w1": 0.1 * jax.random.normal(ks[0], (C, C, 3, 3), jnp.float32),
        "bn1": bn_params(ks[1], ks[2], ks[3], ks[4]),
        "w2": 0.1 * jax.random.normal(ks[5], (C, C, 3, 3), jnp.float32),
        "bn2": bn_params(ks[6], ks[7], ks[8], ks[9]),
    }
    x = jax.random.normal(ks[10], (B, C, H, W), jnp.float32)

    ref = jax.block_until_ready(_ref_forward(params, x))

    # f32 matmul path: tight check of the pad geometry / fusion.
    out_f32 = jax.block_until_ready(
        basic_block_forward(params, x, compute_dtype=jnp.float32))
    assert out_f32.shape == (B, C, H, W), out_f32.shape
    err_f32 = float(jnp.max(jnp.abs(out_f32 - ref)))
    assert err_f32 < 1e-3, f"f32 path mismatch vs reference: {err_f32}"

    # Default bf16 matmul path: loose tolerance vs the f32 reference.
    out_bf16 = jax.block_until_ready(basic_block_forward(params, x))
    assert out_bf16.shape == (B, C, H, W), out_bf16.shape
    err_bf16 = float(jnp.max(jnp.abs(out_bf16 - ref)))
    assert err_bf16 < 1e-1, f"bf16 path mismatch vs reference: {err_bf16}"

    print("KERNEL_OK")
</pallas_src>

<mosaic_0001>
module attributes {stable_mosaic.version = 11 : i64} {
  func.func @_basic_block_kernel(%arg0: i32, %arg1: memref<2x8x256xf32, #tpu.memory_space<vmem>>, %arg2: memref<8x72xf32, #tpu.memory_space<vmem>>, %arg3: memref<8x1xf32, #tpu.memory_space<vmem>>, %arg4: memref<8x72xf32, #tpu.memory_space<vmem>>, %arg5: memref<8x1xf32, #tpu.memory_space<vmem>>, %arg6: memref<2x8x256xf32, #tpu.memory_space<vmem>>, %arg7: memref<8x290xf32, #tpu.memory_space<vmem>>, %arg8: memref<72x512xf32, #tpu.memory_space<vmem>>) attributes {dimension_semantics = [#tpu.dimension_semantics<parallel>], iteration_bounds = array<i64: 1>, scalar_prefetch = 0 : i64, scratch_operands = 2 : i64, tpu.core_type = #tpu.core_type<tc>, window_params = [{transform_indices = @transform_0, window_bounds = array<i64: 2, 8, 256>}, {pipeline_mode = #tpu.pipeline_mode<synchronous>, transform_indices = @transform_1, window_bounds = array<i64: 8, 72>}, {pipeline_mode = #tpu.pipeline_mode<synchronous>, transform_indices = @transform_2, window_bounds = array<i64: 8, 1>}, {pipeline_mode = #tpu.pipeline_mode<synchronous>, transform_indices = @transform_3, window_bounds = array<i64: 8, 72>}, {pipeline_mode = #tpu.pipeline_mode<synchronous>, transform_indices = @transform_4, window_bounds = array<i64: 8, 1>}, {transform_indices = @transform_5, window_bounds = array<i64: 2, 8, 256>}]} {
    %cst = arith.constant 0.000000e+00 : f32
    %0 = vector.broadcast %cst : f32 to vector<8x17xf32>
    %c0 = arith.constant 0 : index
    %c0_0 = arith.constant 0 : index
    %1 = vector.load %arg7[%c0, %c0_0] : memref<8x290xf32, #tpu.memory_space<vmem>>, vector<8x17xf32>
    tpu.vector_store %arg7[%c0, %c0_0], %0 {strides = array<i32>} : memref<8x290xf32, #tpu.memory_space<vmem>>, vector<8x17xf32>,
    %cst_1 = arith.constant 0.000000e+00 : f32
    %2 = vector.broadcast %cst_1 : f32 to vector<8x17xf32>
    %c0_2 = arith.constant 0 : index
    %c273 = arith.constant 273 : index
    %3 = vector.load %arg7[%c0_2, %c273] : memref<8x290xf32, #tpu.memory_space<vmem>>, vector<8x17xf32>
    tpu.vector_store %arg7[%c0_2, %c273], %2 {strides = array<i32>} : memref<8x290xf32, #tpu.memory_space<vmem>>, vector<8x17xf32>,
    %4 = tpu.iota {dimensions = array<i32: 1>} : vector<8x256xi32>
    %c16_i32 = arith.constant 16 : i32
    %c0_i32 = arith.constant 0 : i32
    %5 = arith.cmpi eq, %c16_i32, %c0_i32 : i32
    %c1_i32 = arith.constant 1 : i32
    %6 = arith.select %5, %c1_i32, %c16_i32 : i32
    %7 = vector.broadcast %6 : i32 to vector<8x256xi32>
    %8 = arith.remsi %4, %7 : vector<8x256xi32>
    %c0_i32_3 = arith.constant 0 : i32
    %9 = vector.broadcast %c0_i32_3 : i32 to vector<8x256xi32>
    %10 = arith.cmpi ne, %8, %9 : vector<8x256xi32>
    %c0_i32_4 = arith.constant 0 : i32
    %11 = vector.broadcast %c0_i32_4 : i32 to vector<8x256xi32>
    %12 = arith.cmpi slt, %8, %11 : vector<8x256xi32>
    %c0_i32_5 = arith.constant 0 : i32
    %13 = arith.cmpi slt, %6, %c0_i32_5 : i32
    %14 = vector.broadcast %13 : i1 to vector<8x256xi1>
    %15 = vector.broadcast %14 : vector<8x256xi1> to vector<8x256xi1>
    %16 = arith.xori %12, %15 : vector<8x256xi1>
    %17 = arith.andi %16, %10 : vector<8x256xi1>
    %18 = vector.broadcast %6 : i32 to vector<8x256xi32>
    %19 = arith.addi %8, %18 : vector<8x256xi32>
    %20 = arith.select %17, %19, %8 : vector<8x256xi1>, vector<8x256xi32>
    %c0_i32_6 = arith.constant 0 : i32
    %21 = vector.broadcast %c0_i32_6 : i32 to vector<8x256xi32>
    %22 = arith.cmpi sgt, %20, %21 : vector<8x256xi32>
    %c15_i32 = arith.constant 15 : i32
    %23 = vector.broadcast %c15_i32 : i32 to vector<8x256xi32>
    %24 = arith.cmpi slt, %20, %23 : vector<8x256xi32>
    %c0_7 = arith.constant 0 : index
    %c0_8 = arith.constant 0 : index
    %c0_9 = arith.constant 0 : index
    %25 = vector.load %arg1[%c0_7, %c0_8, %c0_9] : memref<2x8x256xf32, #tpu.memory_space<vmem>>, vector<1x8x256xf32>
    %26 = vector.shape_cast %25 : vector<1x8x256xf32> to vector<8x256xf32>
    %c0_10 = arith.constant 0 : index
    %c17 = arith.constant 17 : index
    %27 = vector.load %arg7[%c0_10, %c17] : memref<8x290xf32, #tpu.memory_space<vmem>>, vector<8x256xf32>
    tpu.vector_store %arg7[%c0_10, %c17], %26 {strides = array<i32>} : memref<8x290xf32, #tpu.memory_space<vmem>>, vector<8x256xf32>,
    %c0_11 = arith.constant 0 : index
    %c0_12 = arith.constant 0 : index
    %28 = vector.load %arg7[%c0_11, %c0_12] : memref<8x290xf32, #tpu.memory_space<vmem>>, vector<8x256xf32>
    %cst_13 = arith.constant 0.000000e+00 : f32
    %29 = vector.broadcast %cst_13 : f32 to vector<8x256xf32>
    %30 = arith.select %22, %28, %29 : vector<8x256xi1>, vector<8x256xf32>
    %c0_14 = arith.constant 0 : index
    %c0_15 = arith.constant 0 : index
    %31 = vector.load %arg8[%c0_14, %c0_15] : memref<72x512xf32, #tpu.memory_space<vmem>>, vector<8x256xf32>
    tpu.vector_store %arg8[%c0_14, %c0_15], %30 {strides = array<i32>} : memref<72x512xf32, #tpu.memory_space<vmem>>, vector<8x256xf32>,
    %c0_16 = arith.constant 0 : index
    %c1 = arith.constant 1 : index
    %32 = vector.load %arg7[%c0_16, %c1] : memref<8x290xf32, #tpu.memory_space<vmem>>, vector<8x256xf32>
    %c8 = arith.constant 8 : index
    %c0_17 = arith.constant 0 : index
    %33 = vector.load %arg8[%c8, %c0_17] : memref<72x512xf32, #tpu.memory_space<vmem>>, vector<8x256xf32>
    tpu.vector_store %arg8[%c8, %c0_17], %32 {strides = array<i32>} : memref<72x512xf32, #tpu.memory_space<vmem>>, vector<8x256xf32>,
    %c0_18 = arith.constant 0 : index
    %c2 = arith.constant 2 : index
    %34 = vector.load %arg7[%c0_18, %c2] : memref<8x290xf32, #tpu.memory_space<vmem>>, vector<8x256xf32>
    %cst_19 = arith.constant 0.000000e+00 : f32
    %35 = vector.broadcast %cst_19 : f32 to vector<8x256xf32>
    %36 = arith.select %24, %34, %35 : vector<8x256xi1>, vector<8x256xf32>
    %c16 = arith.constant 16 : index
    %c0_20 = arith.constant 0 : index
    %37 = vector.load %arg8[%c16, %c0_20] : memref<72x512xf32, #tpu.memory_space<vmem>>, vector<8x256xf32>
    tpu.vector_store %arg8[%c16, %c0_20], %36 {strides = array<i32>} : memref<72x512xf32, #tpu.memory_space<vmem>>, vector<8x256xf32>,
    %c0_21 = arith.constant 0 : index
    %c16_22 = arith.constant 16 : index
    %38 = vector.load %arg7[%c0_21, %c16_22] : memref<8x290xf32, #tpu.memory_space<vmem>>, vector<8x256xf32>
    %cst_23 = arith.constant 0.000000e+00 : f32
    %39 = vector.broadcast %cst_23 : f32 to vector<8x256xf32>
    %40 = arith.select %22, %38, %39 : vector<8x256xi1>, vector<8x256xf32>
    %c24 = arith.constant 24 : index
    %c0_24 = arith.constant 0 : index
    %41 = vector.load %arg8[%c24, %c0_24] : memref<72x512xf32, #tpu.memory_space<vmem>>, vector<8x256xf32>
    tpu.vector_store %arg8[%c24, %c0_24], %40 {strides = array<i32>} : memref<72x512xf32, #tpu.memory_space<vmem>>, vector<8x256xf32>,
    %c0_25 = arith.constant 0 : index
    %c17_26 = arith.constant 17 : index
    %42 = vector.load %arg7[%c0_25, %c17_26] : memref<8x290xf32, #tpu.memory_space<vmem>>, vector<8x256xf32>
    %c32 = arith.constant 32 : index
    %c0_27 = arith.constant 0 : index
    %43 = vector.load %arg8[%c32, %c0_27] : memref<72x512xf32, #tpu.memory_space<vmem>>, vector<8x256xf32>
    tpu.vector_store %arg8[%c32, %c0_27], %42 {strides = array<i32>} : memref<72x512xf32, #tpu.memory_space<vmem>>, vector<8x256xf32>,
    %c0_28 = arith.constant 0 : index
    %c18 = arith.constant 18 : index
    %44 = vector.load %arg7[%c0_28, %c18] : memref<8x290xf32, #tpu.memory_space<vmem>>, vector<8x256xf32>
    %cst_29 = arith.constant 0.000000e+00 : f32
    %45 = vector.broadcast %cst_29 : f32 to vector<8x256xf32>
    %46 = arith.select %24, %44, %45 : vector<8x256xi1>, vector<8x256xf32>
    %c40 = arith.constant 40 : index
    %c0_30 = arith.constant 0 : index
    %47 = vector.load %arg8[%c40, %c0_30] : memref<72x512xf32, #tpu.memory_space<vmem>>, vector<8x256xf32>
    tpu.vector_store %arg8[%c40, %c0_30], %46 {strides = array<i32>} : memref<72x512xf32, #tpu.memory_space<vmem>>, vector<8x256xf32>,
    %c0_31 = arith.constant 0 : index
    %c32_32 = arith.constant 32 : index
    %48 = vector.load %arg7[%c0_31, %c32_32] : memref<8x290xf32, #tpu.memory_space<vmem>>, vector<8x256xf32>
    %cst_33 = arith.constant 0.000000e+00 : f32
    %49 = vector.broadcast %cst_33 : f32 to vector<8x256xf32>
    %50 = arith.select %22, %48, %49 : vector<8x256xi1>, vector<8x256xf32>
    %c48 = arith.constant 48 : index
    %c0_34 = arith.constant 0 : index
    %51 = vector.load %arg8[%c48, %c0_34] : memref<72x512xf32, #tpu.memory_space<vmem>>, vector<8x256xf32>
    tpu.vector_store %arg8[%c48, %c0_34], %50 {strides = array<i32>} : memref<72x512xf32, #tpu.memory_space<vmem>>, vector<8x256xf32>,
    %c0_35 = arith.constant 0 : index
    %c33 = arith.constant 33 : index
    %52 = vector.load %arg7[%c0_35, %c33] : memref<8x290xf32, #tpu.memory_space<vmem>>, vector<8x256xf32>
    %c56 = arith.constant 56 : index
    %c0_36 = arith.constant 0 : index
    %53 = vector.load %arg8[%c56, %c0_36] : memref<72x512xf32, #tpu.memory_space<vmem>>, vector<8x256xf32>
    tpu.vector_store %arg8[%c56, %c0_36], %52 {strides = array<i32>} : memref<72x512xf32, #tpu.memory_space<vmem>>, vector<8x256xf32>,
    %c0_37 = arith.constant 0 : index
    %c34 = arith.constant 34 : index
    %54 = vector.load %arg7[%c0_37, %c34] : memref<8x290xf32, #tpu.memory_space<vmem>>, vector<8x256xf32>
    %cst_38 = arith.constant 0.000000e+00 : f32
    %55 = vector.broadcast %cst_38 : f32 to vector<8x256xf32>
    %56 = arith.select %24, %54, %55 : vector<8x256xi1>, vector<8x256xf32>
    %c64 = arith.constant 64 : index
    %c0_39 = arith.constant 0 : index
    %57 = vector.load %arg8[%c64, %c0_39] : memref<72x512xf32, #tpu.memory_space<vmem>>, vector<8x256xf32>
    tpu.vector_store %arg8[%c64, %c0_39], %56 {strides = array<i32>} : memref<72x512xf32, #tpu.memory_space<vmem>>, vector<8x256xf32>,
    %c1_40 = arith.constant 1 : index
    %c0_41 = arith.constant 0 : index
    %c0_42 = arith.constant 0 : index
    %58 = vector.load %arg1[%c1_40, %c0_41, %c0_42] : memref<2x8x256xf32, #tpu.memory_space<vmem>>, vector<1x8x256xf32>
    %59 = vector.shape_cast %58 : vector<1x8x256xf32> to vector<8x256xf32>
    %c0_43 = arith.constant 0 : index
    %c17_44 = arith.constant 17 : index
    %60 = vector.load %arg7[%c0_43, %c17_44] : memref<8x290xf32, #tpu.memory_space<vmem>>, vector<8x256xf32>
    tpu.vector_store %arg7[%c0_43, %c17_44], %59 {strides = array<i32>} : memref<8x290xf32, #tpu.memory_space<vmem>>, vector<8x256xf32>,
    %c0_45 = arith.constant 0 : index
    %c0_46 = arith.constant 0 : index
    %61 = vector.load %arg7[%c0_45, %c0_46] : memref<8x290xf32, #tpu.memory_space<vmem>>, vector<8x256xf32>
    %cst_47 = arith.constant 0.000000e+00 : f32
    %62 = vector.broadcast %cst_47 : f32 to vector<8x256xf32>
    %63 = arith.select %22, %61, %62 : vector<8x256xi1>, vector<8x256xf32>
    %c0_48 = arith.constant 0 : index
    %c256 = arith.constant 256 : index
    %64 = vector.load %arg8[%c0_48, %c256] : memref<72x512xf32, #tpu.memory_space<vmem>>, vector<8x256xf32>
    tpu.vector_store %arg8[%c0_48, %c256], %63 {strides = array<i32>} : memref<72x512xf32, #tpu.memory_space<vmem>>, vector<8x256xf32>,
    %c0_49 = arith.constant 0 : index
    %c1_50 = arith.constant 1 : index
    %65 = vector.load %arg7[%c0_49, %c1_50] : memref<8x290xf32, #tpu.memory_space<vmem>>, vector<8x256xf32>
    %c8_51 = arith.constant 8 : index
    %c256_52 = arith.constant 256 : index
    %66 = vector.load %arg8[%c8_51, %c256_52] : memref<72x512xf32, #tpu.memory_space<vmem>>, vector<8x256xf32>
    tpu.vector_store %arg8[%c8_51, %c256_52], %65 {strides = array<i32>} : memref<72x512xf32, #tpu.memory_space<vmem>>, vector<8x256xf32>,
    %c0_53 = arith.constant 0 : index
    %c2_54 = arith.constant 2 : index
    %67 = vector.load %arg7[%c0_53, %c2_54] : memref<8x290xf32, #tpu.memory_space<vmem>>, vector<8x256xf32>
    %cst_55 = arith.constant 0.000000e+00 : f32
    %68 = vector.broadcast %cst_55 : f32 to vector<8x256xf32>
    %69 = arith.select %24, %67, %68 : vector<8x256xi1>, vector<8x256xf32>
    %c16_56 = arith.constant 16 : index
    %c256_57 = arith.constant 256 : index
    %70 = vector.load %arg8[%c16_56, %c256_57] : memref<72x512xf32, #tpu.memory_space<vmem>>, vector<8x256xf32>
    tpu.vector_store %arg8[%c16_56, %c256_57], %69 {strides = array<i32>} : memref<72x512xf32, #tpu.memory_space<vmem>>, vector<8x256xf32>,
    %c0_58 = arith.constant 0 : index
    %c16_59 = arith.constant 16 : index
    %71 = vector.load %arg7[%c0_58, %c16_59] : memref<8x290xf32, #tpu.memory_space<vmem>>, vector<8x256xf32>
    %cst_60 = arith.constant 0.000000e+00 : f32
    %72 = vector.broadcast %cst_60 : f32 to vector<8x256xf32>
    %73 = arith.select %22, %71, %72 : vector<8x256xi1>, vector<8x256xf32>
    %c24_61 = arith.constant 24 : index
    %c256_62 = arith.constant 256 : index
    %74 = vector.load %arg8[%c24_61, %c256_62] : memref<72x512xf32, #tpu.memory_space<vmem>>, vector<8x256xf32>
    tpu.vector_store %arg8[%c24_61, %c256_62], %73 {strides = array<i32>} : memref<72x512xf32, #tpu.memory_space<vmem>>, vector<8x256xf32>,
    %c0_63 = arith.constant 0 : index
    %c17_64 = arith.constant 17 : index
    %75 = vector.load %arg7[%c0_63, %c17_64] : memref<8x290xf32, #tpu.memory_space<vmem>>, vector<8x256xf32>
    %c32_65 = arith.constant 32 : index
    %c256_66 = arith.constant 256 : index
    %76 = vector.load %arg8[%c32_65, %c256_66] : memref<72x512xf32, #tpu.memory_space<vmem>>, vector<8x256xf32>
    tpu.vector_store %arg8[%c32_65, %c256_66], %75 {strides = array<i32>} : memref<72x512xf32, #tpu.memory_space<vmem>>, vector<8x256xf32>,
    %c0_67 = arith.constant 0 : index
    %c18_68 = arith.constant 18 : index
    %77 = vector.load %arg7[%c0_67, %c18_68] : memref<8x290xf32, #tpu.memory_space<vmem>>, vector<8x256xf32>
    %cst_69 = arith.constant 0.000000e+00 : f32
    %78 = vector.broadcast %cst_69 : f32 to vector<8x256xf32>
    %79 = arith.select %24, %77, %78 : vector<8x256xi1>, vector<8x256xf32>
    %c40_70 = arith.constant 40 : index
    %c256_71 = arith.constant 256 : index
    %80 = vector.load %arg8[%c40_70, %c256_71] : memref<72x512xf32, #tpu.memory_space<vmem>>, vector<8x256xf32>
    tpu.vector_store %arg8[%c40_70, %c256_71], %79 {strides = array<i32>} : memref<72x512xf32, #tpu.memory_space<vmem>>, vector<8x256xf32>,
    %c0_72 = arith.constant 0 : index
    %c32_73 = arith.constant 32 : index
    %81 = vector.load %arg7[%c0_72, %c32_73] : memref<8x290xf32, #tpu.memory_space<vmem>>, vector<8x256xf32>
    %cst_74 = arith.constant 0.000000e+00 : f32
    %82 = vector.broadcast %cst_74 : f32 to vector<8x256xf32>
    %83 = arith.select %22, %81, %82 : vector<8x256xi1>, vector<8x256xf32>
    %c48_75 = arith.constant 48 : index
    %c256_76 = arith.constant 256 : index
    %84 = vector.load %arg8[%c48_75, %c256_76] : memref<72x512xf32, #tpu.memory_space<vmem>>, vector<8x256xf32>
    tpu.vector_store %arg8[%c48_75, %c256_76], %83 {strides = array<i32>} : memref<72x512xf32, #tpu.memory_space<vmem>>, vector<8x256xf32>,
    %c0_77 = arith.constant 0 : index
    %c33_78 = arith.constant 33 : index
    %85 = vector.load %arg7[%c0_77, %c33_78] : memref<8x290xf32, #tpu.memory_space<vmem>>, vector<8x256xf32>
    %c56_79 = arith.constant 56 : index
    %c256_80 = arith.constant 256 : index
    %86 = vector.load %arg8[%c56_79, %c256_80] : memref<72x512xf32, #tpu.memory_space<vmem>>, vector<8x256xf32>
    tpu.vector_store %arg8[%c56_79, %c256_80], %85 {strides = array<i32>} : memref<72x512xf32, #tpu.memory_space<vmem>>, vector<8x256xf32>,
    %c0_81 = arith.constant 0 : index
    %c34_82 = arith.constant 34 : index
    %87 = vector.load %arg7[%c0_81, %c34_82] : memref<8x290xf32, #tpu.memory_space<vmem>>, vector<8x256xf32>
    %cst_83 = arith.constant 0.000000e+00 : f32
    %88 = vector.broadcast %cst_83 : f32 to vector<8x256xf32>
    %89 = arith.select %24, %87, %88 : vector<8x256xi1>, vector<8x256xf32>
    %c64_84 = arith.constant 64 : index
    %c256_85 = arith.constant 256 : index
    %90 = vector.load %arg8[%c64_84, %c256_85] : memref<72x512xf32, #tpu.memory_space<vmem>>, vector<8x256xf32>
    tpu.vector_store %arg8[%c64_84, %c256_85], %89 {strides = array<i32>} : memref<72x512xf32, #tpu.memory_space<vmem>>, vector<8x256xf32>,
    %c0_86 = arith.constant 0 : index
    %c0_87 = arith.constant 0 : index
    %91 = vector.load %arg2[%c0_86, %c0_87] : memref<8x72xf32, #tpu.memory_space<vmem>>, vector<8x72xf32>
    %c0_88 = arith.constant 0 : index
    %c0_89 = arith.constant 0 : index
    %92 = vector.load %arg8[%c0_88, %c0_89] : memref<72x512xf32, #tpu.memory_space<vmem>>, vector<72x512xf32>
    %cst_90 = arith.constant dense<0.000000e+00> : vector<8x512xf32>
    %93 = tpu.matmul %91, %92, %cst_90 {dimension_numbers = #tpu.dot_dimension_numbers<[1], [0], [0], [1], [0, 0, 1, 1], [], []>} : vector<8x72xf32>, vector<72x512xf32>, vector<8x512xf32> -> vector<8x512xf32>
    %c0_91 = arith.constant 0 : index
    %c0_92 = arith.constant 0 : index
    %94 = vector.load %arg3[%c0_91, %c0_92] : memref<8x1xf32, #tpu.memory_space<vmem>>, vector<8x1xf32>
    %95 = vector.broadcast %94 : vector<8x1xf32> to vector<8x512xf32>
    %96 = arith.addf %93, %95 : vector<8x512xf32>
    %cst_93 = arith.constant 0.000000e+00 : f32
    %97 = vector.broadcast %cst_93 : f32 to vector<8x512xf32>
    %98 = arith.maximumf %96, %97 : vector<8x512xf32>
    %99 = vector.extract_strided_slice %98 {offsets = [0, 0], sizes = [8, 256], strides = [1, 1]} : vector<8x512xf32> to vector<8x256xf32>
    %c0_94 = arith.constant 0 : index
    %c17_95 = arith.constant 17 : index
    %100 = vector.load %arg7[%c0_94, %c17_95] : memref<8x290xf32, #tpu.memory_space<vmem>>, vector<8x256xf32>
    tpu.vector_store %arg7[%c0_94, %c17_95], %99 {strides = array<i32>} : memref<8x290xf32, #tpu.memory_space<vmem>>, vector<8x256xf32>,
    %c0_96 = arith.constant 0 : index
    %c0_97 = arith.constant 0 : index
    %101 = vector.load %arg7[%c0_96, %c0_97] : memref<8x290xf32, #tpu.memory_space<vmem>>, vector<8x256xf32>
    %cst_98 = arith.constant 0.000000e+00 : f32
    %102 = vector.broadcast %cst_98 : f32 to vector<8x256xf32>
    %103 = arith.select %22, %101, %102 : vector<8x256xi1>, vector<8x256xf32>
    %c0_99 = arith.constant 0 : index
    %c0_100 = arith.constant 0 : index
    %104 = vector.load %arg8[%c0_99, %c0_100] : memref<72x512xf32, #tpu.memory_space<vmem>>, vector<8x256xf32>
    tpu.vector_store %arg8[%c0_99, %c0_100], %103 {strides = array<i32>} : memref<72x512xf32, #tpu.memory_space<vmem>>, vector<8x256xf32>,
    %c0_101 = arith.constant 0 : index
    %c1_102 = arith.constant 1 : index
    %105 = vector.load %arg7[%c0_101, %c1_102] : memref<8x290xf32, #tpu.memory_space<vmem>>, vector<8x256xf32>
    %c8_103 = arith.constant 8 : index
    %c0_104 = arith.constant 0 : index
    %106 = vector.load %arg8[%c8_103, %c0_104] : memref<72x512xf32, #tpu.memory_space<vmem>>, vector<8x256xf32>
    tpu.vector_store %arg8[%c8_103, %c0_104], %105 {strides = array<i32>} : memref<72x512xf32, #tpu.memory_space<vmem>>, vector<8x256xf32>,
    %c0_105 = arith.constant 0 : index
    %c2_106 = arith.constant 2 : index
    %107 = vector.load %arg7[%c0_105, %c2_106] : memref<8x290xf32, #tpu.memory_space<vmem>>, vector<8x256xf32>
    %cst_107 = arith.constant 0.000000e+00 : f32
    %108 = vector.broadcast %cst_107 : f32 to vector<8x256xf32>
    %109 = arith.select %24, %107, %108 : vector<8x256xi1>, vector<8x256xf32>
    %c16_108 = arith.constant 16 : index
    %c0_109 = arith.constant 0 : index
    %110 = vector.load %arg8[%c16_108, %c0_109] : memref<72x512xf32, #tpu.memory_space<vmem>>, vector<8x256xf32>
    tpu.vector_store %arg8[%c16_108, %c0_109], %109 {strides = array<i32>} : memref<72x512xf32, #tpu.memory_space<vmem>>, vector<8x256xf32>,
    %c0_110 = arith.constant 0 : index
    %c16_111 = arith.constant 16 : index
    %111 = vector.load %arg7[%c0_110, %c16_111] : memref<8x290xf32, #tpu.memory_space<vmem>>, vector<8x256xf32>
    %cst_112 = arith.constant 0.000000e+00 : f32
    %112 = vector.broadcast %cst_112 : f32 to vector<8x256xf32>
    %113 = arith.select %22, %111, %112 : vector<8x256xi1>, vector<8x256xf32>
    %c24_113 = arith.constant 24 : index
    %c0_114 = arith.constant 0 : index
    %114 = vector.load %arg8[%c24_113, %c0_114] : memref<72x512xf32, #tpu.memory_space<vmem>>, vector<8x256xf32>
    tpu.vector_store %arg8[%c24_113, %c0_114], %113 {strides = array<i32>} : memref<72x512xf32, #tpu.memory_space<vmem>>, vector<8x256xf32>,
    %c0_115 = arith.constant 0 : index
    %c17_116 = arith.constant 17 : index
    %115 = vector.load %arg7[%c0_115, %c17_116] : memref<8x290xf32, #tpu.memory_space<vmem>>, vector<8x256xf32>
    %c32_117 = arith.constant 32 : index
    %c0_118 = arith.constant 0 : index
    %116 = vector.load %arg8[%c32_117, %c0_118] : memref<72x512xf32, #tpu.memory_space<vmem>>, vector<8x256xf32>
    tpu.vector_store %arg8[%c32_117, %c0_118], %115 {strides = array<i32>} : memref<72x512xf32, #tpu.memory_space<vmem>>, vector<8x256xf32>,
    %c0_119 = arith.constant 0 : index
    %c18_120 = arith.constant 18 : index
    %117 = vector.load %arg7[%c0_119, %c18_120] : memref<8x290xf32, #tpu.memory_space<vmem>>, vector<8x256xf32>
    %cst_121 = arith.constant 0.000000e+00 : f32
    %118 = vector.broadcast %cst_121 : f32 to vector<8x256xf32>
    %119 = arith.select %24, %117, %118 : vector<8x256xi1>, vector<8x256xf32>
    %c40_122 = arith.constant 40 : index
    %c0_123 = arith.constant 0 : index
    %120 = vector.load %arg8[%c40_122, %c0_123] : memref<72x512xf32, #tpu.memory_space<vmem>>, vector<8x256xf32>
    tpu.vector_store %arg8[%c40_122, %c0_123], %119 {strides = array<i32>} : memref<72x512xf32, #tpu.memory_space<vmem>>, vector<8x256xf32>,
    %c0_124 = arith.constant 0 : index
    %c32_125 = arith.constant 32 : index
    %121 = vector.load %arg7[%c0_124, %c32_125] : memref<8x290xf32, #tpu.memory_space<vmem>>, vector<8x256xf32>
    %cst_126 = arith.constant 0.000000e+00 : f32
    %122 = vector.broadcast %cst_126 : f32 to vector<8x256xf32>
    %123 = arith.select %22, %121, %122 : vector<8x256xi1>, vector<8x256xf32>
    %c48_127 = arith.constant 48 : index
    %c0_128 = arith.constant 0 : index
    %124 = vector.load %arg8[%c48_127, %c0_128] : memref<72x512xf32, #tpu.memory_space<vmem>>, vector<8x256xf32>
    tpu.vector_store %arg8[%c48_127, %c0_128], %123 {strides = array<i32>} : memref<72x512xf32, #tpu.memory_space<vmem>>, vector<8x256xf32>,
    %c0_129 = arith.constant 0 : index
    %c33_130 = arith.constant 33 : index
    %125 = vector.load %arg7[%c0_129, %c33_130] : memref<8x290xf32, #tpu.memory_space<vmem>>, vector<8x256xf32>
    %c56_131 = arith.constant 56 : index
    %c0_132 = arith.constant 0 : index
    %126 = vector.load %arg8[%c56_131, %c0_132] : memref<72x512xf32, #tpu.memory_space<vmem>>, vector<8x256xf32>
    tpu.vector_store %arg8[%c56_131, %c0_132], %125 {strides = array<i32>} : memref<72x512xf32, #tpu.memory_space<vmem>>, vector<8x256xf32>,
    %c0_133 = arith.constant 0 : index
    %c34_134 = arith.constant 34 : index
    %127 = vector.load %arg7[%c0_133, %c34_134] : memref<8x290xf32, #tpu.memory_space<vmem>>, vector<8x256xf32>
    %cst_135 = arith.constant 0.000000e+00 : f32
    %128 = vector.broadcast %cst_135 : f32 to vector<8x256xf32>
    %129 = arith.select %24, %127, %128 : vector<8x256xi1>, vector<8x256xf32>
    %c64_136 = arith.constant 64 : index
    %c0_137 = arith.constant 0 : index
    %130 = vector.load %arg8[%c64_136, %c0_137] : memref<72x512xf32, #tpu.memory_space<vmem>>, vector<8x256xf32>
    tpu.vector_store %arg8[%c64_136, %c0_137], %129 {strides = array<i32>} : memref<72x512xf32, #tpu.memory_space<vmem>>, vector<8x256xf32>,
    %131 = vector.extract_strided_slice %98 {offsets = [0, 256], sizes = [8, 256], strides = [1, 1]} : vector<8x512xf32> to vector<8x256xf32>
    %c0_138 = arith.constant 0 : index
    %c17_139 = arith.constant 17 : index
    %132 = vector.load %arg7[%c0_138, %c17_139] : memref<8x290xf32, #tpu.memory_space<vmem>>, vector<8x256xf32>
    tpu.vector_store %arg7[%c0_138, %c17_139], %131 {strides = array<i32>} : memref<8x290xf32, #tpu.memory_space<vmem>>, vector<8x256xf32>,
    %c0_140 = arith.constant 0 : index
    %c0_141 = arith.constant 0 : index
    %133 = vector.load %arg7[%c0_140, %c0_141] : memref<8x290xf32, #tpu.memory_space<vmem>>, vector<8x256xf32>
    %cst_142 = arith.constant 0.000000e+00 : f32
    %134 = vector.broadcast %cst_142 : f32 to vector<8x256xf32>
    %135 = arith.select %22, %133, %134 : vector<8x256xi1>, vector<8x256xf32>
    %c0_143 = arith.constant 0 : index
    %c256_144 = arith.constant 256 : index
    %136 = vector.load %arg8[%c0_143, %c256_144] : memref<72x512xf32, #tpu.memory_space<vmem>>, vector<8x256xf32>
    tpu.vector_store %arg8[%c0_143, %c256_144], %135 {strides = array<i32>} : memref<72x512xf32, #tpu.memory_space<vmem>>, vector<8x256xf32>,
    %c0_145 = arith.constant 0 : index
    %c1_146 = arith.constant 1 : index
    %137 = vector.load %arg7[%c0_145, %c1_146] : memref<8x290xf32, #tpu.memory_space<vmem>>, vector<8x256xf32>
    %c8_147 = arith.constant 8 : index
    %c256_148 = arith.constant 256 : index
    %138 = vector.load %arg8[%c8_147, %c256_148] : memref<72x512xf32, #tpu.memory_space<vmem>>, vector<8x256xf32>
    tpu.vector_store %arg8[%c8_147, %c256_148], %137 {strides = array<i32>} : memref<72x512xf32, #tpu.memory_space<vmem>>, vector<8x256xf32>,
    %c0_149 = arith.constant 0 : index
    %c2_150 = arith.constant 2 : index
    %139 = vector.load %arg7[%c0_149, %c2_150] : memref<8x290xf32, #tpu.memory_space<vmem>>, vector<8x256xf32>
    %cst_151 = arith.constant 0.000000e+00 : f32
    %140 = vector.broadcast %cst_151 : f32 to vector<8x256xf32>
    %141 = arith.select %24, %139, %140 : vector<8x256xi1>, vector<8x256xf32>
    %c16_152 = arith.constant 16 : index
    %c256_153 = arith.constant 256 : index
    %142 = vector.load %arg8[%c16_152, %c256_153] : memref<72x512xf32, #tpu.memory_space<vmem>>, vector<8x256xf32>
    tpu.vector_store %arg8[%c16_152, %c256_153], %141 {strides = array<i32>} : memref<72x512xf32, #tpu.memory_space<vmem>>, vector<8x256xf32>,
    %c0_154 = arith.constant 0 : index
    %c16_155 = arith.constant 16 : index
    %143 = vector.load %arg7[%c0_154, %c16_155] : memref<8x290xf32, #tpu.memory_space<vmem>>, vector<8x256xf32>
    %cst_156 = arith.constant 0.000000e+00 : f32
    %144 = vector.broadcast %cst_156 : f32 to vector<8x256xf32>
    %145 = arith.select %22, %143, %144 : vector<8x256xi1>, vector<8x256xf32>
    %c24_157 = arith.constant 24 : index
    %c256_158 = arith.constant 256 : index
    %146 = vector.load %arg8[%c24_157, %c256_158] : memref<72x512xf32, #tpu.memory_space<vmem>>, vector<8x256xf32>
    tpu.vector_store %arg8[%c24_157, %c256_158], %145 {strides = array<i32>} : memref<72x512xf32, #tpu.memory_space<vmem>>, vector<8x256xf32>,
    %c0_159 = arith.constant 0 : index
    %c17_160 = arith.constant 17 : index
    %147 = vector.load %arg7[%c0_159, %c17_160] : memref<8x290xf32, #tpu.memory_space<vmem>>, vector<8x256xf32>
    %c32_161 = arith.constant 32 : index
    %c256_162 = arith.constant 256 : index
    %148 = vector.load %arg8[%c32_161, %c256_162] : memref<72x512xf32, #tpu.memory_space<vmem>>, vector<8x256xf32>
    tpu.vector_store %arg8[%c32_161, %c256_162], %147 {strides = array<i32>} : memref<72x512xf32, #tpu.memory_space<vmem>>, vector<8x256xf32>,
    %c0_163 = arith.constant 0 : index
    %c18_164 = arith.constant 18 : index
    %149 = vector.load %arg7[%c0_163, %c18_164] : memref<8x290xf32, #tpu.memory_space<vmem>>, vector<8x256xf32>
    %cst_165 = arith.constant 0.000000e+00 : f32
    %150 = vector.broadcast %cst_165 : f32 to vector<8x256xf32>
    %151 = arith.select %24, %149, %150 : vector<8x256xi1>, vector<8x256xf32>
    %c40_166 = arith.constant 40 : index
    %c256_167 = arith.constant 256 : index
    %152 = vector.load %arg8[%c40_166, %c256_167] : memref<72x512xf32, #tpu.memory_space<vmem>>, vector<8x256xf32>
    tpu.vector_store %arg8[%c40_166, %c256_167], %151 {strides = array<i32>} : memref<72x512xf32, #tpu.memory_space<vmem>>, vector<8x256xf32>,
    %c0_168 = arith.constant 0 : index
    %c32_169 = arith.constant 32 : index
    %153 = vector.load %arg7[%c0_168, %c32_169] : memref<8x290xf32, #tpu.memory_space<vmem>>, vector<8x256xf32>
    %cst_170 = arith.constant 0.000000e+00 : f32
    %154 = vector.broadcast %cst_170 : f32 to vector<8x256xf32>
    %155 = arith.select %22, %153, %154 : vector<8x256xi1>, vector<8x256xf32>
    %c48_171 = arith.constant 48 : index
    %c256_172 = arith.constant 256 : index
    %156 = vector.load %arg8[%c48_171, %c256_172] : memref<72x512xf32, #tpu.memory_space<vmem>>, vector<8x256xf32>
    tpu.vector_store %arg8[%c48_171, %c256_172], %155 {strides = array<i32>} : memref<72x512xf32, #tpu.memory_space<vmem>>, vector<8x256xf32>,
    %c0_173 = arith.constant 0 : index
    %c33_174 = arith.constant 33 : index
    %157 = vector.load %arg7[%c0_173, %c33_174] : memref<8x290xf32, #tpu.memory_space<vmem>>, vector<8x256xf32>
    %c56_175 = arith.constant 56 : index
    %c256_176 = arith.constant 256 : index
    %158 = vector.load %arg8[%c56_175, %c256_176] : memref<72x512xf32, #tpu.memory_space<vmem>>, vector<8x256xf32>
    tpu.vector_store %arg8[%c56_175, %c256_176], %157 {strides = array<i32>} : memref<72x512xf32, #tpu.memory_space<vmem>>, vector<8x256xf32>,
    %c0_177 = arith.constant 0 : index
    %c34_178 = arith.constant 34 : index
    %159 = vector.load %arg7[%c0_177, %c34_178] : memref<8x290xf32, #tpu.memory_space<vmem>>, vector<8x256xf32>
    %cst_179 = arith.constant 0.000000e+00 : f32
    %160 = vector.broadcast %cst_179 : f32 to vector<8x256xf32>
    %161 = arith.select %24, %159, %160 : vector<8x256xi1>, vector<8x256xf32>
    %c64_180 = arith.constant 64 : index
    %c256_181 = arith.constant 256 : index
    %162 = vector.load %arg8[%c64_180, %c256_181] : memref<72x512xf32, #tpu.memory_space<vmem>>, vector<8x256xf32>
    tpu.vector_store %arg8[%c64_180, %c256_181], %161 {strides = array<i32>} : memref<72x512xf32, #tpu.memory_space<vmem>>, vector<8x256xf32>,
    %c0_182 = arith.constant 0 : index
    %c0_183 = arith.constant 0 : index
    %163 = vector.load %arg4[%c0_182, %c0_183] : memref<8x72xf32, #tpu.memory_space<vmem>>, vector<8x72xf32>
    %c0_184 = arith.constant 0 : index
    %c0_185 = arith.constant 0 : index
    %164 = vector.load %arg8[%c0_184, %c0_185] : memref<72x512xf32, #tpu.memory_space<vmem>>, vector<72x512xf32>
    %cst_186 = arith.constant dense<0.000000e+00> : vector<8x512xf32>
    %165 = tpu.matmul %163, %164, %cst_186 {dimension_numbers = #tpu.dot_dimension_numbers<[1], [0], [0], [1], [0, 0, 1, 1], [], []>} : vector<8x72xf32>, vector<72x512xf32>, vector<8x512xf32> -> vector<8x512xf32>
    %c0_187 = arith.constant 0 : index
    %c0_188 = arith.constant 0 : index
    %166 = vector.load %arg5[%c0_187, %c0_188] : memref<8x1xf32, #tpu.memory_space<vmem>>, vector<8x1xf32>
    %167 = vector.broadcast %166 : vector<8x1xf32> to vector<8x512xf32>
    %168 = arith.addf %165, %167 : vector<8x512xf32>
    %169 = vector.extract_strided_slice %168 {offsets = [0, 0], sizes = [8, 256], strides = [1, 1]} : vector<8x512xf32> to vector<8x256xf32>
    %c0_189 = arith.constant 0 : index
    %c0_190 = arith.constant 0 : index
    %c0_191 = arith.constant 0 : index
    %170 = vector.load %arg1[%c0_189, %c0_190, %c0_191] : memref<2x8x256xf32, #tpu.memory_space<vmem>>, vector<1x8x256xf32>
    %171 = vector.shape_cast %170 : vector<1x8x256xf32> to vector<8x256xf32>
    %172 = arith.addf %169, %171 : vector<8x256xf32>
    %cst_192 = arith.constant 0.000000e+00 : f32
    %173 = vector.broadcast %cst_192 : f32 to vector<8x256xf32>
    %174 = arith.maximumf %172, %173 : vector<8x256xf32>
    %c0_193 = arith.constant 0 : index
    %c0_194 = arith.constant 0 : index
    %c0_195 = arith.constant 0 : index
    %175 = vector.load %arg6[%c0_193, %c0_194, %c0_195] : memref<2x8x256xf32, #tpu.memory_space<vmem>>, vector<1x8x256xf32>
    %176 = vector.shape_cast %175 : vector<1x8x256xf32> to vector<8x256xf32>
    %177 = vector.shape_cast %174 : vector<8x256xf32> to vector<1x8x256xf32>
    tpu.vector_store %arg6[%c0_193, %c0_194, %c0_195], %177 {strides = array<i32>} : memref<2x8x256xf32, #tpu.memory_space<vmem>>, vector<1x8x256xf32>,
    %178 = vector.extract_strided_slice %168 {offsets = [0, 256], sizes = [8, 256], strides = [1, 1]} : vector<8x512xf32> to vector<8x256xf32>
    %c1_196 = arith.constant 1 : index
    %c0_197 = arith.constant 0 : index
    %c0_198 = arith.constant 0 : index
    %179 = vector.load %arg1[%c1_196, %c0_197, %c0_198] : memref<2x8x256xf32, #tpu.memory_space<vmem>>, vector<1x8x256xf32>
    %180 = vector.shape_cast %179 : vector<1x8x256xf32> to vector<8x256xf32>
    %181 = arith.addf %178, %180 : vector<8x256xf32>
    %cst_199 = arith.constant 0.000000e+00 : f32
    %182 = vector.broadcast %cst_199 : f32 to vector<8x256xf32>
    %183 = arith.maximumf %181, %182 : vector<8x256xf32>
    %c1_200 = arith.constant 1 : index
    %c0_201 = arith.constant 0 : index
    %c0_202 = arith.constant 0 : index
    %184 = vector.load %arg6[%c1_200, %c0_201, %c0_202] : memref<2x8x256xf32, #tpu.memory_space<vmem>>, vector<1x8x256xf32>
    %185 = vector.shape_cast %184 : vector<1x8x256xf32> to vector<8x256xf32>
    %186 = vector.shape_cast %183 : vector<8x256xf32> to vector<1x8x256xf32>
    tpu.vector_store %arg6[%c1_200, %c0_201, %c0_202], %186 {strides = array<i32>} : memref<2x8x256xf32, #tpu.memory_space<vmem>>, vector<1x8x256xf32>,
    return
  }
  func.func @transform_0(%arg0: i32) -> (i32, i32, i32) {
    %c0_i32 = arith.constant 0 : i32
    %c0_i32_0 = arith.constant 0 : i32
    %c0_i32_1 = arith.constant 0 : i32
    return %arg0, %c0_i32, %c0_i32_0 : i32, i32, i32
  }
  func.func @transform_1(%arg0: i32) -> (i32, i32) {
    %c0_i32 = arith.constant 0 : i32
    %c0_i32_0 = arith.constant 0 : i32
    %c0_i32_1 = arith.constant 0 : i32
    return %c0_i32, %c0_i32_0 : i32, i32
  }
  func.func @transform_2(%arg0: i32) -> (i32, i32) {
    %c0_i32 = arith.constant 0 : i32
    %c0_i32_0 = arith.constant 0 : i32
    %c0_i32_1 = arith.constant 0 : i32
    return %c0_i32, %c0_i32_0 : i32, i32
  }
  func.func @transform_3(%arg0: i32) -> (i32, i32) {
    %c0_i32 = arith.constant 0 : i32
    %c0_i32_0 = arith.constant 0 : i32
    %c0_i32_1 = arith.constant 0 : i32
    return %c0_i32, %c0_i32_0 : i32, i32
  }
  func.func @transform_4(%arg0: i32) -> (i32, i32) {
    %c0_i32 = arith.constant 0 : i32
    %c0_i32_0 = arith.constant 0 : i32
    %c0_i32_1 = arith.constant 0 : i32
    return %c0_i32, %c0_i32_0 : i32, i32
  }
  func.func @transform_5(%arg0: i32) -> (i32, i32, i32) {
    %c0_i32 = arith.constant 0 : i32
    %c0_i32_0 = arith.constant 0 : i32
    %c0_i32_1 = arith.constant 0 : i32
    return %arg0, %c0_i32, %c0_i32_0 : i32, i32, i32
  }
}

</mosaic_0001>

<llo_original>
// kernel: tpu_custom_call.1
$region0: #{tpu_custom_call.1}
  #allocation0 [shape = 'u32[]', space=smem, size = 0x4, offset = 0x4, fixed_abs, tag = 'smem constant byte address 0x4 - core index']
  #allocation1 [shape = 'u32[72,128]{1,0:T(1,128)}', space=vmem, size = 0x9000, scoped, tag = 'internal scratch']
  #allocation2 [shape = 'f32[8,290]{1,0:T(8,128)}', space=vmem, size = 0x3000, scoped, tag = 'scratch operand']
  #allocation3 [shape = 'f32[72,512]{1,0:T(8,128)}', space=vmem, size = 0x24000, scoped, tag = 'scratch operand']
  %s0 = inlined_call_operand.hbm [shape: f32[2,8,256], index: 0, kind: input, shape index: {}]
  %s1 = inlined_call_operand.vmem [shape: f32[8,72], index: 1, kind: input, shape index: {}]
  %s2 = inlined_call_operand.vmem [shape: f32[8,1], index: 2, kind: input, shape index: {}]
  %s3 = inlined_call_operand.vmem [shape: f32[8,72], index: 3, kind: input, shape index: {}]
  %s4 = inlined_call_operand.vmem [shape: f32[8,1], index: 4, kind: input, shape index: {}]
  %s5 = inlined_call_operand.hbm [shape: f32[2,8,256], index: 5, kind: output, shape index: {}]
  %s6 = sld [smem:[#allocation0]]
  $region34: #{tpu_custom_call.1} parent=0
    _
  %s8 = ssub.s32 1, %s6
  %s9 = scalar_select 0, %s8, %s6
  $region1: #{tpu_custom_call.1} parent=0
    #allocation4 [shape = 'u8[16384]{0}', space=vmem, size = 0x4000, scoped, tag = 'input window, operand 0, single buffered']
    #allocation5 [shape = 's32[1]{0}', space=sflag, size = 0x4, scoped, tag = 'scoped memory for tpu_custom_call.1']
    #allocation6 [shape = 's32[1]{0}', space=sflag, size = 0x4, scoped, tag = 'scoped memory for tpu_custom_call.1']
    #allocation7 [shape = 'u8[16384]{0}', space=vmem, size = 0x4000, scoped, tag = 'output window, operand 0, single buffered']
    %10 = vsyncpa [#allocation5], 0
    %11 = vsyncpa [#allocation6], 0
    // Predicated region
    $region2: #{tpu_custom_call.1} parent=1 // pred_check
      _
    $region3: #{tpu_custom_call.1} parent=1 // pred_check_branch
      %13 = sbr.rel (0) target = $region5
    $region4: #{tpu_custom_call.1} parent=1 // pred_region
      %15 = vsyncadd [#allocation5], 0
      %s16 = sshll.u32 %s0, 4
      %s17 = int_to_ptr.hbm [resolvable:$true] %s16
      %s18 = sshll.u32 [#allocation4], 4
      %s19 = int_to_ptr.vmem [resolvable:$true] %s18
      %24 = dma.hbm_to_vmem [thread:$0]  %s17, 512, %s19, [#allocation5], 256, 256, 16
    $region5: #{tpu_custom_call.1} parent=1 // pred_fallthru
      _
    // Predicated region
    $region6: #{tpu_custom_call.1} parent=1 // pred_check
      _
    $region7: #{tpu_custom_call.1} parent=1 // pred_check_branch
      %26 = sbr.rel (0) target = $region9
    $region8: #{tpu_custom_call.1} parent=1 // pred_region
      _
    $region9: #{tpu_custom_call.1} parent=1 // pred_fallthru
      _
    // Predicated region
    $region10: #{tpu_custom_call.1} parent=1 // pred_check
      _
    $region11: #{tpu_custom_call.1} parent=1 // pred_check_branch
      %28 = sbr.rel (0) target = $region13
    $region12: #{tpu_custom_call.1} parent=1 // pred_region
      _
    $region13: #{tpu_custom_call.1} parent=1 // pred_fallthru
      _
    // Predicated region
    $region14: #{tpu_custom_call.1} parent=1 // pred_check
      _
    $region15: #{tpu_custom_call.1} parent=1 // pred_check_branch
      %30 = sbr.rel (0) target = $region17
    $region16: #{tpu_custom_call.1} parent=1 // pred_region
      _
    $region17: #{tpu_custom_call.1} parent=1 // pred_fallthru
      _
    // Predicated region
    $region18: #{tpu_custom_call.1} parent=1 // pred_check
      _
    $region19: #{tpu_custom_call.1} parent=1 // pred_check_branch
      %32 = sbr.rel (0) target = $region21
    $region20: #{tpu_custom_call.1} parent=1 // pred_region
      _
    $region21: #{tpu_custom_call.1} parent=1 // pred_fallthru
      _
    // Predicated region
    $region22: #{tpu_custom_call.1} parent=1 // pred_check
      _
    $region23: #{tpu_custom_call.1} parent=1 // pred_check_branch
      %34 = sbr.rel (0) target = $region25
    $region24: #{tpu_custom_call.1} parent=1 // pred_region
      %36 = dma.done [#allocation5], 512
    $region25: #{tpu_custom_call.1} parent=1 // pred_fallthru
      _
    %vm37 = vcmask 138240
    %38 = vst.msk [vmem:[#allocation2] sm:$0xff] %vm37, 0.0
    %vm39 = vcmask 277640
    %40 = vst.msk [vmem:[#allocation2 + $0x10] sm:$0xff] %vm39, 0.0
    %v41 = vlaneseq
    %v42 = vand.u32 %v41, 127
    %v43 = vadd.s32 %v42, 128
    %vm44 = vcmp.lt.s32.totalorder %v42, 0
    %v45 = vsub.s32 0, %v42
    %v46 = vsel %vm44, %v45, %v42
    %v47 = vshrl.u32 %v46, 4
    %v48 = vand.u32 %v46, 15
    %v49 = vsub.s32 0, %v48
    %v50 = vsel %vm44, %v49, %v48
    %vm51 = vcmp.lt.s32.totalorder %v43, 0
    %v52 = vsub.s32 0, %v43
    %v53 = vsel %vm51, %v52, %v43
    %v54 = vshrl.u32 %v53, 4
    %v55 = vand.u32 %v53, 15
    %v56 = vsub.s32 0, %v55
    %v57 = vsel %vm51, %v56, %v55
    %vm58 = vcmp.ne.s32.totalorder %v50, 0
    %vm59 = vcmp.ne.s32.totalorder %v57, 0
    %vm60 = vcmp.lt.s32.totalorder %v50, 0
    %vm61 = vcmp.lt.s32.totalorder %v57, 0
    %vm62 = vmand %vm60, %vm58
    %vm63 = vmand %vm61, %vm59
    %v64 = vadd.s32 %v50, 16
    %v65 = vadd.s32 %v57, 16
    %v66 = vsel %vm62, %v64, %v50
    %v67 = vsel %vm63, %v65, %v57
    %vm68 = vcmp.gt.s32.totalorder %v66, 0
    %vm69 = vcmp.gt.s32.totalorder %v67, 0
    %vm70 = vcmp.lt.s32.totalorder %v66, 15
    %vm71 = vcmp.lt.s32.totalorder %v67, 15
    %v72 = vld [vmem:[#allocation4] sm:$0xff]
    %v73 = vld [vmem:[#allocation4 + $0x8] sm:$0xff]
    %76 = vrot.lane.b32.xlu0 %v72, 17
    %v77 = vpop.permute.xlu0 %76
    %78 = vrot.lane.b32.xlu0 %v73, 17
    %v79 = vpop.permute.xlu0 %78
    %v80 = vsel %vm37, %v77, %v79
    %vm84 = vcmask 1047688
    %85 = vst.msk [vmem:[#allocation2] sm:$0xff] %vm84, %v77
    %86 = vst [vmem:[#allocation2 + $0x8] sm:$0xff] %v80
    %87 = vst.msk [vmem:[#allocation2 + $0x10] sm:$0xff] %vm37, %v79
    %v88 = vld [vmem:[#allocation2] sm:$0xff]
    %v89 = vld [vmem:[#allocation2 + $0x8] sm:$0xff]
    %v90 = vsel %vm68, %v88, 0.0
    %v91 = vsel %vm69, %v89, 0.0
    %92 = vst [vmem:[#allocation3] sm:$0xff] %v90
    %93 = vst [vmem:[#allocation3 + $0x8] sm:$0xff] %v91
    %v94 = vld [vmem:[#allocation2] sm:$0xff]
    %v95 = vld [vmem:[#allocation2 + $0x8] sm:$0xff]
    %v96 = vld [vmem:[#allocation2 + $0x10] sm:$0xff]
    %100 = vrot.lane.b32.xlu0 %v94, 127
    %v101 = vpop.permute.xlu0 %100
    %102 = vrot.lane.b32.xlu0 %v95, 127
    %v103 = vpop.permute.xlu0 %102
    %104 = vrot.lane.b32.xlu0 %v96, 127
    %v105 = vpop.permute.xlu0 %104
    %vm106 = vcmask 1039360
    %v107 = vsel %vm106, %v101, %v103
    %v108 = vsel %vm106, %v103, %v105
    %111 = vst [vmem:[#allocation3 + $0x20] sm:$0xff] %v107
    %112 = vst [vmem:[#allocation3 + $0x28] sm:$0xff] %v108
    %v113 = vld [vmem:[#allocation2] sm:$0xff]
    %v114 = vld [vmem:[#allocation2 + $0x8] sm:$0xff]
    %v115 = vld [vmem:[#allocation2 + $0x10] sm:$0xff]
    %119 = vrot.lane.b32.xlu0 %v113, 126
    %v120 = vpop.permute.xlu0 %119
    %121 = vrot.lane.b32.xlu0 %v114, 126
    %v122 = vpop.permute.xlu0 %121
    %123 = vrot.lane.b32.xlu0 %v115, 126
    %v124 = vpop.permute.xlu0 %123
    %vm125 = vcmask 1031168
    %v126 = vsel %vm125, %v120, %v122
    %v127 = vsel %vm125, %v122, %v124
    %v130 = vsel %vm70, %v126, 0.0
    %v131 = vsel %vm71, %v127, 0.0
    %132 = vst [vmem:[#allocation3 + $0x40] sm:$0xff] %v130
    %133 = vst [vmem:[#allocation3 + $0x48] sm:$0xff] %v131
    %v134 = vld [vmem:[#allocation2] sm:$0xff]
    %v135 = vld [vmem:[#allocation2 + $0x8] sm:$0xff]
    %v136 = vld [vmem:[#allocation2 + $0x10] sm:$0xff]
    %140 = vrot.lane.b32.xlu0 %v134, 112
    %v141 = vpop.permute.xlu0 %140
    %142 = vrot.lane.b32.xlu0 %v135, 112
    %v143 = vpop.permute.xlu0 %142
    %144 = vrot.lane.b32.xlu0 %v136, 112
    %v145 = vpop.permute.xlu0 %144
    %vm146 = vcmask 916480
    %v147 = vsel %vm146, %v141, %v143
    %v148 = vsel %vm146, %v143, %v145
    %v151 = vsel %vm68, %v147, 0.0
    %v152 = vsel %vm69, %v148, 0.0
    %153 = vst [vmem:[#allocation3 + $0x60] sm:$0xff] %v151
    %154 = vst [vmem:[#allocation3 + $0x68] sm:$0xff] %v152
    %v155 = vld [vmem:[#allocation2] sm:$0xff]
    %v156 = vld [vmem:[#allocation2 + $0x8] sm:$0xff]
    %v157 = vld [vmem:[#allocation2 + $0x10] sm:$0xff]
    %161 = vrot.lane.b32.xlu0 %v155, 111
    %v162 = vpop.permute.xlu0 %161
    %163 = vrot.lane.b32.xlu0 %v156, 111
    %v164 = vpop.permute.xlu0 %163
    %165 = vrot.lane.b32.xlu0 %v157, 111
    %v166 = vpop.permute.xlu0 %165
    %vm167 = vcmask 908288
    %v168 = vsel %vm167, %v162, %v164
    %v169 = vsel %vm167, %v164, %v166
    %172 = vst [vmem:[#allocation3 + $0x80] sm:$0xff] %v168
    %173 = vst [vmem:[#allocation3 + $0x88] sm:$0xff] %v169
    %v174 = vld [vmem:[#allocation2] sm:$0xff]
    %v175 = vld [vmem:[#allocation2 + $0x8] sm:$0xff]
    %v176 = vld [vmem:[#allocation2 + $0x10] sm:$0xff]
    %180 = vrot.lane.b32.xlu0 %v174, 110
    %v181 = vpop.permute.xlu0 %180
    %182 = vrot.lane.b32.xlu0 %v175, 110
    %v183 = vpop.permute.xlu0 %182
    %184 = vrot.lane.b32.xlu0 %v176, 110
    %v185 = vpop.permute.xlu0 %184
    %vm186 = vcmask 900096
    %v187 = vsel %vm186, %v181, %v183
    %v188 = vsel %vm186, %v183, %v185
    %v191 = vsel %vm70, %v187, 0.0
    %v192 = vsel %vm71, %v188, 0.0
    %193 = vst [vmem:[#allocation3 + $0xa0] sm:$0xff] %v191
    %194 = vst [vmem:[#allocation3 + $0xa8] sm:$0xff] %v192
    %v195 = vld [vmem:[#allocation2] sm:$0xff]
    %v196 = vld [vmem:[#allocation2 + $0x8] sm:$0xff]
    %v197 = vld [vmem:[#allocation2 + $0x10] sm:$0xff]
    %201 = vrot.lane.b32.xlu0 %v195, 96
    %v202 = vpop.permute.xlu0 %201
    %203 = vrot.lane.b32.xlu0 %v196, 96
    %v204 = vpop.permute.xlu0 %203
    %205 = vrot.lane.b32.xlu0 %v197, 96
    %v206 = vpop.permute.xlu0 %205
    %vm207 = vcmask 785408
    %v208 = vsel %vm207, %v202, %v204
    %v209 = vsel %vm207, %v204, %v206
    %v212 = vsel %vm68, %v208, 0.0
    %v213 = vsel %vm69, %v209, 0.0
    %214 = vst [vmem:[#allocation3 + $0xc0] sm:$0xff] %v212
    %215 = vst [vmem:[#allocation3 + $0xc8] sm:$0xff] %v213
    %v216 = vld [vmem:[#allocation2] sm:$0xff]
    %v217 = vld [vmem:[#allocation2 + $0x8] sm:$0xff]
    %v218 = vld [vmem:[#allocation2 + $0x10] sm:$0xff]
    %222 = vrot.lane.b32.xlu0 %v216, 95
    %v223 = vpop.permute.xlu0 %222
    %224 = vrot.lane.b32.xlu0 %v217, 95
    %v225 = vpop.permute.xlu0 %224
    %226 = vrot.lane.b32.xlu0 %v218, 95
    %v227 = vpop.permute.xlu0 %226
    %vm228 = vcmask 777216
    %v229 = vsel %vm228, %v223, %v225
    %v230 = vsel %vm228, %v225, %v227
    %233 = vst [vmem:[#allocation3 + $0xe0] sm:$0xff] %v229
    %234 = vst [vmem:[#allocation3 + $0xe8] sm:$0xff] %v230
    %v235 = vld [vmem:[#allocation2] sm:$0xff]
    %v236 = vld [vmem:[#allocation2 + $0x8] sm:$0xff]
    %v237 = vld [vmem:[#allocation2 + $0x10] sm:$0xff]
    %241 = vrot.lane.b32.xlu0 %v235, 94
    %v242 = vpop.permute.xlu0 %241
    %243 = vrot.lane.b32.xlu0 %v236, 94
    %v244 = vpop.permute.xlu0 %243
    %245 = vrot.lane.b32.xlu0 %v237, 94
    %v246 = vpop.permute.xlu0 %245
    %vm247 = vcmask 769024
    %v248 = vsel %vm247, %v242, %v244
    %v249 = vsel %vm247, %v244, %v246
    %v252 = vsel %vm70, %v248, 0.0
    %v253 = vsel %vm71, %v249, 0.0
    %254 = vst [vmem:[#allocation3 + $0x100] sm:$0xff] %v252
    %255 = vst [vmem:[#allocation3 + $0x108] sm:$0xff] %v253
    %s256 = scalar_lea.vmem [#allocation4], 16
    %v257 = vld [vmem:[%s256] sm:$0xff]
    %v258 = vld [vmem:[%s256 + $0x8] sm:$0xff]
    %261 = vrot.lane.b32.xlu0 %v257, 17
    %v262 = vpop.permute.xlu0 %261
    %263 = vrot.lane.b32.xlu0 %v258, 17
    %v264 = vpop.permute.xlu0 %263
    %v265 = vsel %vm37, %v262, %v264
    %269 = vst.msk [vmem:[#allocation2] sm:$0xff] %vm84, %v262
    %270 = vst [vmem:[#allocation2 + $0x8] sm:$0xff] %v265
    %271 = vst.msk [vmem:[#allocation2 + $0x10] sm:$0xff] %vm37, %v264
    %v272 = vld [vmem:[#allocation2] sm:$0xff]
    %v273 = vld [vmem:[#allocation2 + $0x8] sm:$0xff]
    %v274 = vsel %vm68, %v272, 0.0
    %v275 = vsel %vm69, %v273, 0.0
    %276 = vst [vmem:[#allocation3 + $0x10] sm:$0xff] %v274
    %277 = vst [vmem:[#allocation3 + $0x18] sm:$0xff] %v275
    %v278 = vld [vmem:[#allocation2] sm:$0xff]
    %v279 = vld [vmem:[#allocation2 + $0x8] sm:$0xff]
    %v280 = vld [vmem:[#allocation2 + $0x10] sm:$0xff]
    %284 = vrot.lane.b32.xlu0 %v278, 127
    %v285 = vpop.permute.xlu0 %284
    %286 = vrot.lane.b32.xlu0 %v279, 127
    %v287 = vpop.permute.xlu0 %286
    %288 = vrot.lane.b32.xlu0 %v280, 127
    %v289 = vpop.permute.xlu0 %288
    %v290 = vsel %vm106, %v285, %v287
    %v291 = vsel %vm106, %v287, %v289
    %294 = vst [vmem:[#allocation3 + $0x30] sm:$0xff] %v290
    %295 = vst [vmem:[#allocation3 + $0x38] sm:$0xff] %v291
    %v296 = vld [vmem:[#allocation2] sm:$0xff]
    %v297 = vld [vmem:[#allocation2 + $0x8] sm:$0xff]
    %v298 = vld [vmem:[#allocation2 + $0x10] sm:$0xff]
    %302 = vrot.lane.b32.xlu0 %v296, 126
    %v303 = vpop.permute.xlu0 %302
    %304 = vrot.lane.b32.xlu0 %v297, 126
    %v305 = vpop.permute.xlu0 %304
    %306 = vrot.lane.b32.xlu0 %v298, 126
    %v307 = vpop.permute.xlu0 %306
    %v308 = vsel %vm125, %v303, %v305
    %v309 = vsel %vm125, %v305, %v307
    %v312 = vsel %vm70, %v308, 0.0
    %v313 = vsel %vm71, %v309, 0.0
    %314 = vst [vmem:[#allocation3 + $0x50] sm:$0xff] %v312
    %315 = vst [vmem:[#allocation3 + $0x58] sm:$0xff] %v313
    %v316 = vld [vmem:[#allocation2] sm:$0xff]
    %v317 = vld [vmem:[#allocation2 + $0x8] sm:$0xff]
    %v318 = vld [vmem:[#allocation2 + $0x10] sm:$0xff]
    %322 = vrot.lane.b32.xlu0 %v316, 112
    %v323 = vpop.permute.xlu0 %322
    %324 = vrot.lane.b32.xlu0 %v317, 112
    %v325 = vpop.permute.xlu0 %324
    %326 = vrot.lane.b32.xlu0 %v318, 112
    %v327 = vpop.permute.xlu0 %326
    %v328 = vsel %vm146, %v323, %v325
    %v329 = vsel %vm146, %v325, %v327
    %v332 = vsel %vm68, %v328, 0.0
    %v333 = vsel %vm69, %v329, 0.0
    %334 = vst [vmem:[#allocation3 + $0x70] sm:$0xff] %v332
    %335 = vst [vmem:[#allocation3 + $0x78] sm:$0xff] %v333
    %v336 = vld [vmem:[#allocation2] sm:$0xff]
    %v337 = vld [vmem:[#allocation2 + $0x8] sm:$0xff]
    %v338 = vld [vmem:[#allocation2 + $0x10] sm:$0xff]
    %342 = vrot.lane.b32.xlu0 %v336, 111
    %v343 = vpop.permute.xlu0 %342
    %344 = vrot.lane.b32.xlu0 %v337, 111
    %v345 = vpop.permute.xlu0 %344
    %346 = vrot.lane.b32.xlu0 %v338, 111
    %v347 = vpop.permute.xlu0 %346
    %v348 = vsel %vm167, %v343, %v345
    %v349 = vsel %vm167, %v345, %v347
    %352 = vst [vmem:[#allocation3 + $0x90] sm:$0xff] %v348
    %353 = vst [vmem:[#allocation3 + $0x98] sm:$0xff] %v349
    %v354 = vld [vmem:[#allocation2] sm:$0xff]
    %v355 = vld [vmem:[#allocation2 + $0x8] sm:$0xff]
    %v356 = vld [vmem:[#allocation2 + $0x10] sm:$0xff]
    %360 = vrot.lane.b32.xlu0 %v354, 110
    %v361 = vpop.permute.xlu0 %360
    %362 = vrot.lane.b32.xlu0 %v355, 110
    %v363 = vpop.permute.xlu0 %362
    %364 = vrot.lane.b32.xlu0 %v356, 110
    %v365 = vpop.permute.xlu0 %364
    %v366 = vsel %vm186, %v361, %v363
    %v367 = vsel %vm186, %v363, %v365
    %v370 = vsel %vm70, %v366, 0.0
    %v371 = vsel %vm71, %v367, 0.0
    %372 = vst [vmem:[#allocation3 + $0xb0] sm:$0xff] %v370
    %373 = vst [vmem:[#allocation3 + $0xb8] sm:$0xff] %v371
    %v374 = vld [vmem:[#allocation2] sm:$0xff]
    %v375 = vld [vmem:[#allocation2 + $0x8] sm:$0xff]
    %v376 = vld [vmem:[#allocation2 + $0x10] sm:$0xff]
    %380 = vrot.lane.b32.xlu0 %v374, 96
    %v381 = vpop.permute.xlu0 %380
    %382 = vrot.lane.b32.xlu0 %v375, 96
    %v383 = vpop.permute.xlu0 %382
    %384 = vrot.lane.b32.xlu0 %v376, 96
    %v385 = vpop.permute.xlu0 %384
    %v386 = vsel %vm207, %v381, %v383
    %v387 = vsel %vm207, %v383, %v385
    %v390 = vsel %vm68, %v386, 0.0
    %v391 = vsel %vm69, %v387, 0.0
    %392 = vst [vmem:[#allocation3 + $0xd0] sm:$0xff] %v390
    %393 = vst [vmem:[#allocation3 + $0xd8] sm:$0xff] %v391
    %v394 = vld [vmem:[#allocation2] sm:$0xff]
    %v395 = vld [vmem:[#allocation2 + $0x8] sm:$0xff]
    %v396 = vld [vmem:[#allocation2 + $0x10] sm:$0xff]
    %400 = vrot.lane.b32.xlu0 %v394, 95
    %v401 = vpop.permute.xlu0 %400
    %402 = vrot.lane.b32.xlu0 %v395, 95
    %v403 = vpop.permute.xlu0 %402
    %404 = vrot.lane.b32.xlu0 %v396, 95
    %v405 = vpop.permute.xlu0 %404
    %v406 = vsel %vm228, %v401, %v403
    %v407 = vsel %vm228, %v403, %v405
    %410 = vst [vmem:[#allocation3 + $0xf0] sm:$0xff] %v406
    %411 = vst [vmem:[#allocation3 + $0xf8] sm:$0xff] %v407
    %v412 = vld [vmem:[#allocation2] sm:$0xff]
    %v413 = vld [vmem:[#allocation2 + $0x8] sm:$0xff]
    %v414 = vld [vmem:[#allocation2 + $0x10] sm:$0xff]
    %418 = vrot.lane.b32.xlu0 %v412, 94
    %v419 = vpop.permute.xlu0 %418
    %420 = vrot.lane.b32.xlu0 %v413, 94
    %v421 = vpop.permute.xlu0 %420
    %422 = vrot.lane.b32.xlu0 %v414, 94
    %v423 = vpop.permute.xlu0 %422
    %v424 = vsel %vm247, %v419, %v421
    %v425 = vsel %vm247, %v421, %v423
    %v428 = vsel %vm70, %v424, 0.0
    %v429 = vsel %vm71, %v425, 0.0
    %430 = vst [vmem:[#allocation3 + $0x110] sm:$0xff] %v428
    %431 = vst [vmem:[#allocation3 + $0x118] sm:$0xff] %v429
    %v432 = vld [vmem:[%s1] sm:$0xff]
    %v433 = vld [vmem:[#allocation3] sm:$0xff]
    %v434 = vld [vmem:[#allocation3 + $0x8] sm:$0xff]
    %v435 = vld [vmem:[#allocation3 + $0x10] sm:$0xff]
    %v436 = vld [vmem:[#allocation3 + $0x18] sm:$0xff]
    %v437 = vld [vmem:[#allocation3 + $0x20] sm:$0xff]
    %v438 = vld [vmem:[#allocation3 + $0x28] sm:$0xff]
    %v439 = vld [vmem:[#allocation3 + $0x30] sm:$0xff]
    %v440 = vld [vmem:[#allocation3 + $0x38] sm:$0xff]
    %v441 = vld [vmem:[#allocation3 + $0x40] sm:$0xff]
    %v442 = vld [vmem:[#allocation3 + $0x48] sm:$0xff]
    %v443 = vld [vmem:[#allocation3 + $0x50] sm:$0xff]
    %v444 = vld [vmem:[#allocation3 + $0x58] sm:$0xff]
    %v445 = vld [vmem:[#allocation3 + $0x60] sm:$0xff]
    %v446 = vld [vmem:[#allocation3 + $0x68] sm:$0xff]
    %v447 = vld [vmem:[#allocation3 + $0x70] sm:$0xff]
    %v448 = vld [vmem:[#allocation3 + $0x78] sm:$0xff]
    %v449 = vld [vmem:[#allocation3 + $0x80] sm:$0xff]
    %v450 = vld [vmem:[#allocation3 + $0x88] sm:$0xff]
    %v451 = vld [vmem:[#allocation3 + $0x90] sm:$0xff]
    %v452 = vld [vmem:[#allocation3 + $0x98] sm:$0xff]
    %v453 = vld [vmem:[#allocation3 + $0xa0] sm:$0xff]
    %v454 = vld [vmem:[#allocation3 + $0xa8] sm:$0xff]
    %v455 = vld [vmem:[#allocation3 + $0xb0] sm:$0xff]
    %v456 = vld [vmem:[#allocation3 + $0xb8] sm:$0xff]
    %v457 = vld [vmem:[#allocation3 + $0xc0] sm:$0xff]
    %v458 = vld [vmem:[#allocation3 + $0xc8] sm:$0xff]
    %v459 = vld [vmem:[#allocation3 + $0xd0] sm:$0xff]
    %v460 = vld [vmem:[#allocation3 + $0xd8] sm:$0xff]
    %v461 = vld [vmem:[#allocation3 + $0xe0] sm:$0xff]
    %v462 = vld [vmem:[#allocation3 + $0xe8] sm:$0xff]
    %v463 = vld [vmem:[#allocation3 + $0xf0] sm:$0xff]
    %v464 = vld [vmem:[#allocation3 + $0xf8] sm:$0xff]
    %v465 = vld [vmem:[#allocation3 + $0x100] sm:$0xff]
    %v466 = vld [vmem:[#allocation3 + $0x108] sm:$0xff]
    %v467 = vld [vmem:[#allocation3 + $0x110] sm:$0xff]
    %v468 = vld [vmem:[#allocation3 + $0x118] sm:$0xff]
    %v469 = vld [vmem:[%s2] sm:$0xff]
    %471 = vset.pattern.permute.xlu0 0
    %472 = vperm.xlu0 %471, %v469
    %v473 = vpop.permute.xlu0 %472
    %vm475 = vcmask 588800
    %v477 = vsel %vm475, %v432, 0
    %479 = vmatpush.msra.mxu0 0.0
    %480 = vmatpush.msra.mxu0 0.0
    %481 = vmatpush.msra.mxu0 0.0
    %482 = vmatpush.msra.mxu0 0.0
    %483 = vmatpush.msra.mxu0 0.0
    %484 = vmatpush.msra.mxu0 0.0
    %485 = vmatpush.msra.mxu0 0.0
    %486 = vmatpush.msra.mxu0 %v465
    %487 = vmatpush.msra.mxu0 %v461
    %488 = vmatpush.msra.mxu0 %v457
    %489 = vmatpush.msra.mxu0 %v453
    %490 = vmatpush.msra.mxu0 %v449
    %491 = vmatpush.msra.mxu0 %v445
    %492 = vmatpush.msra.mxu0 %v441
    %493 = vmatpush.msra.mxu0 %v437
    %494 = vmatpush.msra.mxu0 %v433
    %495 = vmatmul.f32.gmra.mxu0 %v477
    %v496 = vpop.f32.mrf.mxu0
    %v497 = vadd.f32 %v473, %v496
    %498 = vdwg.mxu0
    %499 = vmatpush.msra.mxu0 0.0
    %500 = vmatpush.msra.mxu0 0.0
    %501 = vmatpush.msra.mxu0 0.0
    %502 = vmatpush.msra.mxu0 0.0
    %503 = vmatpush.msra.mxu0 0.0
    %504 = vmatpush.msra.mxu0 0.0
    %505 = vmatpush.msra.mxu0 0.0
    %506 = vmatpush.msra.mxu0 %v466
    %507 = vmatpush.msra.mxu0 %v462
    %508 = vmatpush.msra.mxu0 %v458
    %509 = vmatpush.msra.mxu0 %v454
    %510 = vmatpush.msra.mxu0 %v450
    %511 = vmatpush.msra.mxu0 %v446
    %512 = vmatpush.msra.mxu0 %v442
    %513 = vmatpush.msra.mxu0 %v438
    %514 = vmatpush.msra.mxu0 %v434
    %515 = vmatmul.f32.gmra.mxu0 %v477
    %v516 = vpop.f32.mrf.mxu0
    %v517 = vadd.f32 %v473, %v516
    %518 = vdwg.mxu0
    %519 = vmatpush.msra.mxu0 0.0
    %520 = vmatpush.msra.mxu0 0.0
    %521 = vmatpush.msra.mxu0 0.0
    %522 = vmatpush.msra.mxu0 0.0
    %523 = vmatpush.msra.mxu0 0.0
    %524 = vmatpush.msra.mxu0 0.0
    %525 = vmatpush.msra.mxu0 0.0
    %526 = vmatpush.msra.mxu0 %v467
    %527 = vmatpush.msra.mxu0 %v463
    %528 = vmatpush.msra.mxu0 %v459
    %529 = vmatpush.msra.mxu0 %v455
    %530 = vmatpush.msra.mxu0 %v451
    %531 = vmatpush.msra.mxu0 %v447
    %532 = vmatpush.msra.mxu0 %v443
    %533 = vmatpush.msra.mxu0 %v439
    %534 = vmatpush.msra.mxu0 %v435
    %535 = vmatmul.f32.gmra.mxu0 %v477
    %v536 = vpop.f32.mrf.mxu0
    %v537 = vadd.f32 %v473, %v536
    %538 = vdwg.mxu0
    %539 = vmatpush.msra.mxu0 0.0
    %540 = vmatpush.msra.mxu0 0.0
    %541 = vmatpush.msra.mxu0 0.0
    %542 = vmatpush.msra.mxu0 0.0
    %543 = vmatpush.msra.mxu0 0.0
    %544 = vmatpush.msra.mxu0 0.0
    %545 = vmatpush.msra.mxu0 0.0
    %546 = vmatpush.msra.mxu0 %v468
    %547 = vmatpush.msra.mxu0 %v464
    %548 = vmatpush.msra.mxu0 %v460
    %549 = vmatpush.msra.mxu0 %v456
    %550 = vmatpush.msra.mxu0 %v452
    %551 = vmatpush.msra.mxu0 %v448
    %552 = vmatpush.msra.mxu0 %v444
    %553 = vmatpush.msra.mxu0 %v440
    %554 = vmatpush.msra.mxu0 %v436
    %555 = vmatmul.f32.gmra.mxu0 %v477
    %v556 = vpop.f32.mrf.mxu0
    %v557 = vadd.f32 %v473, %v556
    %558 = vdwg.mxu0
    %v559 = vmax.f32 %v497, 0.0
    %v560 = vmax.f32 %v517, 0.0
    %v561 = vmax.f32 %v537, 0.0
    %v562 = vmax.f32 %v557, 0.0
    %565 = vrot.lane.b32.xlu0 %v559, 17
    %v566 = vpop.permute.xlu0 %565
    %567 = vrot.lane.b32.xlu0 %v560, 17
    %v568 = vpop.permute.xlu0 %567
    %v569 = vsel %vm37, %v566, %v568
    %573 = vst.msk [vmem:[#allocation2] sm:$0xff] %vm84, %v566
    %574 = vst [vmem:[#allocation2 + $0x8] sm:$0xff] %v569
    %575 = vst.msk [vmem:[#allocation2 + $0x10] sm:$0xff] %vm37, %v568
    %v576 = vld [vmem:[#allocation2] sm:$0xff]
    %v577 = vld [vmem:[#allocation2 + $0x8] sm:$0xff]
    %v578 = vsel %vm68, %v576, 0.0
    %v579 = vsel %vm69, %v577, 0.0
    %580 = vst [vmem:[#allocation3] sm:$0xff] %v578
    %581 = vst [vmem:[#allocation3 + $0x8] sm:$0xff] %v579
    %v582 = vld [vmem:[#allocation2] sm:$0xff]
    %v583 = vld [vmem:[#allocation2 + $0x8] sm:$0xff]
    %v584 = vld [vmem:[#allocation2 + $0x10] sm:$0xff]
    %588 = vrot.lane.b32.xlu0 %v582, 127
    %v589 = vpop.permute.xlu0 %588
    %590 = vrot.lane.b32.xlu0 %v583, 127
    %v591 = vpop.permute.xlu0 %590
    %592 = vrot.lane.b32.xlu0 %v584, 127
    %v593 = vpop.permute.xlu0 %592
    %v594 = vsel %vm106, %v589, %v591
    %v595 = vsel %vm106, %v591, %v593
    %598 = vst [vmem:[#allocation3 + $0x20] sm:$0xff] %v594
    %599 = vst [vmem:[#allocation3 + $0x28] sm:$0xff] %v595
    %v600 = vld [vmem:[#allocation2] sm:$0xff]
    %v601 = vld [vmem:[#allocation2 + $0x8] sm:$0xff]
    %v602 = vld [vmem:[#allocation2 + $0x10] sm:$0xff]
    %606 = vrot.lane.b32.xlu0 %v600, 126
    %v607 = vpop.permute.xlu0 %606
    %608 = vrot.lane.b32.xlu0 %v601, 126
    %v609 = vpop.permute.xlu0 %608
    %610 = vrot.lane.b32.xlu0 %v602, 126
    %v611 = vpop.permute.xlu0 %610
    %v612 = vsel %vm125, %v607, %v609
    %v613 = vsel %vm125, %v609, %v611
    %v616 = vsel %vm70, %v612, 0.0
    %v617 = vsel %vm71, %v613, 0.0
    %618 = vst [vmem:[#allocation3 + $0x40] sm:$0xff] %v616
    %619 = vst [vmem:[#allocation3 + $0x48] sm:$0xff] %v617
    %v620 = vld [vmem:[#allocation2] sm:$0xff]
    %v621 = vld [vmem:[#allocation2 + $0x8] sm:$0xff]
    %v622 = vld [vmem:[#allocation2 + $0x10] sm:$0xff]
    %626 = vrot.lane.b32.xlu0 %v620, 112
    %v627 = vpop.permute.xlu0 %626
    %628 = vrot.lane.b32.xlu0 %v621, 112
    %v629 = vpop.permute.xlu0 %628
    %630 = vrot.lane.b32.xlu0 %v622, 112
    %v631 = vpop.permute.xlu0 %630
    %v632 = vsel %vm146, %v627, %v629
    %v633 = vsel %vm146, %v629, %v631
    %v636 = vsel %vm68, %v632, 0.0
    %v637 = vsel %vm69, %v633, 0.0
    %638 = vst [vmem:[#allocation3 + $0x60] sm:$0xff] %v636
    %639 = vst [vmem:[#allocation3 + $0x68] sm:$0xff] %v637
    %v640 = vld [vmem:[#allocation2] sm:$0xff]
    %v641 = vld [vmem:[#allocation2 + $0x8] sm:$0xff]
    %v642 = vld [vmem:[#allocation2 + $0x10] sm:$0xff]
    %646 = vrot.lane.b32.xlu0 %v640, 111
    %v647 = vpop.permute.xlu0 %646
    %648 = vrot.lane.b32.xlu0 %v641, 111
    %v649 = vpop.permute.xlu0 %648
    %650 = vrot.lane.b32.xlu0 %v642, 111
    %v651 = vpop.permute.xlu0 %650
    %v652 = vsel %vm167, %v647, %v649
    %v653 = vsel %vm167, %v649, %v651
    %656 = vst [vmem:[#allocation3 + $0x80] sm:$0xff] %v652
    %657 = vst [vmem:[#allocation3 + $0x88] sm:$0xff] %v653
    %v658 = vld [vmem:[#allocation2] sm:$0xff]
    %v659 = vld [vmem:[#allocation2 + $0x8] sm:$0xff]
    %v660 = vld [vmem:[#allocation2 + $0x10] sm:$0xff]
    %664 = vrot.lane.b32.xlu0 %v658, 110
    %v665 = vpop.permute.xlu0 %664
    %666 = vrot.lane.b32.xlu0 %v659, 110
    %v667 = vpop.permute.xlu0 %666
    %668 = vrot.lane.b32.xlu0 %v660, 110
    %v669 = vpop.permute.xlu0 %668
    %v670 = vsel %vm186, %v665, %v667
    %v671 = vsel %vm186, %v667, %v669
    %v674 = vsel %vm70, %v670, 0.0
    %v675 = vsel %vm71, %v671, 0.0
    %676 = vst [vmem:[#allocation3 + $0xa0] sm:$0xff] %v674
    %677 = vst [vmem:[#allocation3 + $0xa8] sm:$0xff] %v675
    %v678 = vld [vmem:[#allocation2] sm:$0xff]
    %v679 = vld [vmem:[#allocation2 + $0x8] sm:$0xff]
    %v680 = vld [vmem:[#allocation2 + $0x10] sm:$0xff]
    %684 = vrot.lane.b32.xlu0 %v678, 96
    %v685 = vpop.permute.xlu0 %684
    %686 = vrot.lane.b32.xlu0 %v679, 96
    %v687 = vpop.permute.xlu0 %686
    %688 = vrot.lane.b32.xlu0 %v680, 96
    %v689 = vpop.permute.xlu0 %688
    %v690 = vsel %vm207, %v685, %v687
    %v691 = vsel %vm207, %v687, %v689
    %v694 = vsel %vm68, %v690, 0.0
    %v695 = vsel %vm69, %v691, 0.0
    %696 = vst [vmem:[#allocation3 + $0xc0] sm:$0xff] %v694
    %697 = vst [vmem:[#allocation3 + $0xc8] sm:$0xff] %v695
    %v698 = vld [vmem:[#allocation2] sm:$0xff]
    %v699 = vld [vmem:[#allocation2 + $0x8] sm:$0xff]
    %v700 = vld [vmem:[#allocation2 + $0x10] sm:$0xff]
    %704 = vrot.lane.b32.xlu0 %v698, 95
    %v705 = vpop.permute.xlu0 %704
    %706 = vrot.lane.b32.xlu0 %v699, 95
    %v707 = vpop.permute.xlu0 %706
    %708 = vrot.lane.b32.xlu0 %v700, 95
    %v709 = vpop.permute.xlu0 %708
    %v710 = vsel %vm228, %v705, %v707
    %v711 = vsel %vm228, %v707, %v709
    %714 = vst [vmem:[#allocation3 + $0xe0] sm:$0xff] %v710
    %715 = vst [vmem:[#allocation3 + $0xe8] sm:$0xff] %v711
    %v716 = vld [vmem:[#allocation2] sm:$0xff]
    %v717 = vld [vmem:[#allocation2 + $0x8] sm:$0xff]
    %v718 = vld [vmem:[#allocation2 + $0x10] sm:$0xff]
    %722 = vrot.lane.b32.xlu0 %v716, 94
    %v723 = vpop.permute.xlu0 %722
    %724 = vrot.lane.b32.xlu0 %v717, 94
    %v725 = vpop.permute.xlu0 %724
    %726 = vrot.lane.b32.xlu0 %v718, 94
    %v727 = vpop.permute.xlu0 %726
    %v728 = vsel %vm247, %v723, %v725
    %v729 = vsel %vm247, %v725, %v727
    %v732 = vsel %vm70, %v728, 0.0
    %v733 = vsel %vm71, %v729, 0.0
    %734 = vst [vmem:[#allocation3 + $0x100] sm:$0xff] %v732
    %735 = vst [vmem:[#allocation3 + $0x108] sm:$0xff] %v733
    %738 = vrot.lane.b32.xlu0 %v561, 17
    %v739 = vpop.permute.xlu0 %738
    %740 = vrot.lane.b32.xlu0 %v562, 17
    %v741 = vpop.permute.xlu0 %740
    %v742 = vsel %vm37, %v739, %v741
    %746 = vst.msk [vmem:[#allocation2] sm:$0xff] %vm84, %v739
    %747 = vst [vmem:[#allocation2 + $0x8] sm:$0xff] %v742
    %748 = vst.msk [vmem:[#allocation2 + $0x10] sm:$0xff] %vm37, %v741
    %v749 = vld [vmem:[#allocation2] sm:$0xff]
    %v750 = vld [vmem:[#allocation2 + $0x8] sm:$0xff]
    %v751 = vsel %vm68, %v749, 0.0
    %v752 = vsel %vm69, %v750, 0.0
    %753 = vst [vmem:[#allocation3 + $0x10] sm:$0xff] %v751
    %754 = vst [vmem:[#allocation3 + $0x18] sm:$0xff] %v752
    %v755 = vld [vmem:[#allocation2] sm:$0xff]
    %v756 = vld [vmem:[#allocation2 + $0x8] sm:$0xff]
    %v757 = vld [vmem:[#allocation2 + $0x10] sm:$0xff]
    %761 = vrot.lane.b32.xlu0 %v755, 127
    %v762 = vpop.permute.xlu0 %761
    %763 = vrot.lane.b32.xlu0 %v756, 127
    %v764 = vpop.permute.xlu0 %763
    %765 = vrot.lane.b32.xlu0 %v757, 127
    %v766 = vpop.permute.xlu0 %765
    %v767 = vsel %vm106, %v762, %v764
    %v768 = vsel %vm106, %v764, %v766
    %771 = vst [vmem:[#allocation3 + $0x30] sm:$0xff] %v767
    %772 = vst [vmem:[#allocation3 + $0x38] sm:$0xff] %v768
    %v773 = vld [vmem:[#allocation2] sm:$0xff]
    %v774 = vld [vmem:[#allocation2 + $0x8] sm:$0xff]
    %v775 = vld [vmem:[#allocation2 + $0x10] sm:$0xff]
    %779 = vrot.lane.b32.xlu0 %v773, 126
    %v780 = vpop.permute.xlu0 %779
    %781 = vrot.lane.b32.xlu0 %v774, 126
    %v782 = vpop.permute.xlu0 %781
    %783 = vrot.lane.b32.xlu0 %v775, 126
    %v784 = vpop.permute.xlu0 %783
    %v785 = vsel %vm125, %v780, %v782
    %v786 = vsel %vm125, %v782, %v784
    %v789 = vsel %vm70, %v785, 0.0
    %v790 = vsel %vm71, %v786, 0.0
    %791 = vst [vmem:[#allocation3 + $0x50] sm:$0xff] %v789
    %792 = vst [vmem:[#allocation3 + $0x58] sm:$0xff] %v790
    %v793 = vld [vmem:[#allocation2] sm:$0xff]
    %v794 = vld [vmem:[#allocation2 + $0x8] sm:$0xff]
    %v795 = vld [vmem:[#allocation2 + $0x10] sm:$0xff]
    %799 = vrot.lane.b32.xlu0 %v793, 112
    %v800 = vpop.permute.xlu0 %799
    %801 = vrot.lane.b32.xlu0 %v794, 112
    %v802 = vpop.permute.xlu0 %801
    %803 = vrot.lane.b32.xlu0 %v795, 112
    %v804 = vpop.permute.xlu0 %803
    %v805 = vsel %vm146, %v800, %v802
    %v806 = vsel %vm146, %v802, %v804
    %v809 = vsel %vm68, %v805, 0.0
    %v810 = vsel %vm69, %v806, 0.0
    %811 = vst [vmem:[#allocation3 + $0x70] sm:$0xff] %v809
    %812 = vst [vmem:[#allocation3 + $0x78] sm:$0xff] %v810
    %v813 = vld [vmem:[#allocation2] sm:$0xff]
    %v814 = vld [vmem:[#allocation2 + $0x8] sm:$0xff]
    %v815 = vld [vmem:[#allocation2 + $0x10] sm:$0xff]
    %819 = vrot.lane.b32.xlu0 %v813, 111
    %v820 = vpop.permute.xlu0 %819
    %821 = vrot.lane.b32.xlu0 %v814, 111
    %v822 = vpop.permute.xlu0 %821
    %823 = vrot.lane.b32.xlu0 %v815, 111
    %v824 = vpop.permute.xlu0 %823
    %v825 = vsel %vm167, %v820, %v822
    %v826 = vsel %vm167, %v822, %v824
    %829 = vst [vmem:[#allocation3 + $0x90] sm:$0xff] %v825
    %830 = vst [vmem:[#allocation3 + $0x98] sm:$0xff] %v826
    %v831 = vld [vmem:[#allocation2] sm:$0xff]
    %v832 = vld [vmem:[#allocation2 + $0x8] sm:$0xff]
    %v833 = vld [vmem:[#allocation2 + $0x10] sm:$0xff]
    %837 = vrot.lane.b32.xlu0 %v831, 110
    %v838 = vpop.permute.xlu0 %837
    %839 = vrot.lane.b32.xlu0 %v832, 110
    %v840 = vpop.permute.xlu0 %839
    %841 = vrot.lane.b32.xlu0 %v833, 110
    %v842 = vpop.permute.xlu0 %841
    %v843 = vsel %vm186, %v838, %v840
    %v844 = vsel %vm186, %v840, %v842
    %v847 = vsel %vm70, %v843, 0.0
    %v848 = vsel %vm71, %v844, 0.0
    %849 = vst [vmem:[#allocation3 + $0xb0] sm:$0xff] %v847
    %850 = vst [vmem:[#allocation3 + $0xb8] sm:$0xff] %v848
    %v851 = vld [vmem:[#allocation2] sm:$0xff]
    %v852 = vld [vmem:[#allocation2 + $0x8] sm:$0xff]
    %v853 = vld [vmem:[#allocation2 + $0x10] sm:$0xff]
    %857 = vrot.lane.b32.xlu0 %v851, 96
    %v858 = vpop.permute.xlu0 %857
    %859 = vrot.lane.b32.xlu0 %v852, 96
    %v860 = vpop.permute.xlu0 %859
    %861 = vrot.lane.b32.xlu0 %v853, 96
    %v862 = vpop.permute.xlu0 %861
    %v863 = vsel %vm207, %v858, %v860
    %v864 = vsel %vm207, %v860, %v862
    %v867 = vsel %vm68, %v863, 0.0
    %v868 = vsel %vm69, %v864, 0.0
    %869 = vst [vmem:[#allocation3 + $0xd0] sm:$0xff] %v867
    %870 = vst [vmem:[#allocation3 + $0xd8] sm:$0xff] %v868
    %v871 = vld [vmem:[#allocation2] sm:$0xff]
    %v872 = vld [vmem:[#allocation2 + $0x8] sm:$0xff]
    %v873 = vld [vmem:[#allocation2 + $0x10] sm:$0xff]
    %877 = vrot.lane.b32.xlu0 %v871, 95
    %v878 = vpop.permute.xlu0 %877
    %879 = vrot.lane.b32.xlu0 %v872, 95
    %v880 = vpop.permute.xlu0 %879
    %881 = vrot.lane.b32.xlu0 %v873, 95
    %v882 = vpop.permute.xlu0 %881
    %v883 = vsel %vm228, %v878, %v880
    %v884 = vsel %vm228, %v880, %v882
    %887 = vst [vmem:[#allocation3 + $0xf0] sm:$0xff] %v883
    %888 = vst [vmem:[#allocation3 + $0xf8] sm:$0xff] %v884
    %v889 = vld [vmem:[#allocation2] sm:$0xff]
    %v890 = vld [vmem:[#allocation2 + $0x8] sm:$0xff]
    %v891 = vld [vmem:[#allocation2 + $0x10] sm:$0xff]
    %895 = vrot.lane.b32.xlu0 %v889, 94
    %v896 = vpop.permute.xlu0 %895
    %897 = vrot.lane.b32.xlu0 %v890, 94
    %v898 = vpop.permute.xlu0 %897
    %899 = vrot.lane.b32.xlu0 %v891, 94
    %v900 = vpop.permute.xlu0 %899
    %v901 = vsel %vm247, %v896, %v898
    %v902 = vsel %vm247, %v898, %v900
    %v905 = vsel %vm70, %v901, 0.0
    %v906 = vsel %vm71, %v902, 0.0
    %907 = vst [vmem:[#allocation3 + $0x110] sm:$0xff] %v905
    %908 = vst [vmem:[#allocation3 + $0x118] sm:$0xff] %v906
    %v909 = vld [vmem:[%s3] sm:$0xff]
    %v910 = vld [vmem:[#allocation3] sm:$0xff]
    %v911 = vld [vmem:[#allocation3 + $0x8] sm:$0xff]
    %v912 = vld [vmem:[#allocation3 + $0x10] sm:$0xff]
    %v913 = vld [vmem:[#allocation3 + $0x18] sm:$0xff]
    %v914 = vld [vmem:[#allocation3 + $0x20] sm:$0xff]
    %v915 = vld [vmem:[#allocation3 + $0x28] sm:$0xff]
    %v916 = vld [vmem:[#allocation3 + $0x30] sm:$0xff]
    %v917 = vld [vmem:[#allocation3 + $0x38] sm:$0xff]
    %v918 = vld [vmem:[#allocation3 + $0x40] sm:$0xff]
    %v919 = vld [vmem:[#allocation3 + $0x48] sm:$0xff]
    %v920 = vld [vmem:[#allocation3 + $0x50] sm:$0xff]
    %v921 = vld [vmem:[#allocation3 + $0x58] sm:$0xff]
    %v922 = vld [vmem:[#allocation3 + $0x60] sm:$0xff]
    %v923 = vld [vmem:[#allocation3 + $0x68] sm:$0xff]
    %v924 = vld [vmem:[#allocation3 + $0x70] sm:$0xff]
    %v925 = vld [vmem:[#allocation3 + $0x78] sm:$0xff]
    %v926 = vld [vmem:[#allocation3 + $0x80] sm:$0xff]
    %v927 = vld [vmem:[#allocation3 + $0x88] sm:$0xff]
    %v928 = vld [vmem:[#allocation3 + $0x90] sm:$0xff]
    %v929 = vld [vmem:[#allocation3 + $0x98] sm:$0xff]
    %v930 = vld [vmem:[#allocation3 + $0xa0] sm:$0xff]
    %v931 = vld [vmem:[#allocation3 + $0xa8] sm:$0xff]
    %v932 = vld [vmem:[#allocation3 + $0xb0] sm:$0xff]
    %v933 = vld [vmem:[#allocation3 + $0xb8] sm:$0xff]
    %v934 = vld [vmem:[#allocation3 + $0xc0] sm:$0xff]
    %v935 = vld [vmem:[#allocation3 + $0xc8] sm:$0xff]
    %v936 = vld [vmem:[#allocation3 + $0xd0] sm:$0xff]
    %v937 = vld [vmem:[#allocation3 + $0xd8] sm:$0xff]
    %v938 = vld [vmem:[#allocation3 + $0xe0] sm:$0xff]
    %v939 = vld [vmem:[#allocation3 + $0xe8] sm:$0xff]
    %v940 = vld [vmem:[#allocation3 + $0xf0] sm:$0xff]
    %v941 = vld [vmem:[#allocation3 + $0xf8] sm:$0xff]
    %v942 = vld [vmem:[#allocation3 + $0x100] sm:$0xff]
    %v943 = vld [vmem:[#allocation3 + $0x108] sm:$0xff]
    %v944 = vld [vmem:[#allocation3 + $0x110] sm:$0xff]
    %v945 = vld [vmem:[#allocation3 + $0x118] sm:$0xff]
    %v946 = vld [vmem:[%s4] sm:$0xff]
    %948 = vset.pattern.permute.xlu0 0
    %949 = vperm.xlu0 %948, %v946
    %v950 = vpop.permute.xlu0 %949
    %v953 = vsel %vm475, %v909, 0
    %955 = vmatpush.msra.mxu0 0.0
    %956 = vmatpush.msra.mxu0 0.0
    %957 = vmatpush.msra.mxu0 0.0
    %958 = vmatpush.msra.mxu0 0.0
    %959 = vmatpush.msra.mxu0 0.0
    %960 = vmatpush.msra.mxu0 0.0
    %961 = vmatpush.msra.mxu0 0.0
    %962 = vmatpush.msra.mxu0 %v942
    %963 = vmatpush.msra.mxu0 %v938
    %964 = vmatpush.msra.mxu0 %v934
    %965 = vmatpush.msra.mxu0 %v930
    %966 = vmatpush.msra.mxu0 %v926
    %967 = vmatpush.msra.mxu0 %v922
    %968 = vmatpush.msra.mxu0 %v918
    %969 = vmatpush.msra.mxu0 %v914
    %970 = vmatpush.msra.mxu0 %v910
    %971 = vmatmul.f32.gmra.mxu0 %v953
    %v972 = vpop.f32.mrf.mxu0
    %v973 = vadd.f32 %v950, %v972
    %974 = vdwg.mxu0
    %975 = vmatpush.msra.mxu0 0.0
    %976 = vmatpush.msra.mxu0 0.0
    %977 = vmatpush.msra.mxu0 0.0
    %978 = vmatpush.msra.mxu0 0.0
    %979 = vmatpush.msra.mxu0 0.0
    %980 = vmatpush.msra.mxu0 0.0
    %981 = vmatpush.msra.mxu0 0.0
    %982 = vmatpush.msra.mxu0 %v943
    %983 = vmatpush.msra.mxu0 %v939
    %984 = vmatpush.msra.mxu0 %v935
    %985 = vmatpush.msra.mxu0 %v931
    %986 = vmatpush.msra.mxu0 %v927
    %987 = vmatpush.msra.mxu0 %v923
    %988 = vmatpush.msra.mxu0 %v919
    %989 = vmatpush.msra.mxu0 %v915
    %990 = vmatpush.msra.mxu0 %v911
    %991 = vmatmul.f32.gmra.mxu0 %v953
    %v992 = vpop.f32.mrf.mxu0
    %v993 = vadd.f32 %v950, %v992
    %994 = vdwg.mxu0
    %995 = vmatpush.msra.mxu0 0.0
    %996 = vmatpush.msra.mxu0 0.0
    %997 = vmatpush.msra.mxu0 0.0
    %998 = vmatpush.msra.mxu0 0.0
    %999 = vmatpush.msra.mxu0 0.0
    %1000 = vmatpush.msra.mxu0 0.0
    %1001 = vmatpush.msra.mxu0 0.0
    %1002 = vmatpush.msra.mxu0 %v944
    %1003 = vmatpush.msra.mxu0 %v940
    %1004 = vmatpush.msra.mxu0 %v936
    %1005 = vmatpush.msra.mxu0 %v932
    %1006 = vmatpush.msra.mxu0 %v928
    %1007 = vmatpush.msra.mxu0 %v924
    %1008 = vmatpush.msra.mxu0 %v920
    %1009 = vmatpush.msra.mxu0 %v916
    %1010 = vmatpush.msra.mxu0 %v912
    %1011 = vmatmul.f32.gmra.mxu0 %v953
    %v1012 = vpop.f32.mrf.mxu0
    %v1013 = vadd.f32 %v950, %v1012
    %1014 = vdwg.mxu0
    %1015 = vmatpush.msra.mxu0 0.0
    %1016 = vmatpush.msra.mxu0 0.0
    %1017 = vmatpush.msra.mxu0 0.0
    %1018 = vmatpush.msra.mxu0 0.0
    %1019 = vmatpush.msra.mxu0 0.0
    %1020 = vmatpush.msra.mxu0 0.0
    %1021 = vmatpush.msra.mxu0 0.0
    %1022 = vmatpush.msra.mxu0 %v945
    %1023 = vmatpush.msra.mxu0 %v941
    %1024 = vmatpush.msra.mxu0 %v937
    %1025 = vmatpush.msra.mxu0 %v933
    %1026 = vmatpush.msra.mxu0 %v929
    %1027 = vmatpush.msra.mxu0 %v925
    %1028 = vmatpush.msra.mxu0 %v921
    %1029 = vmatpush.msra.mxu0 %v917
    %1030 = vmatpush.msra.mxu0 %v913
    %1031 = vmatmul.f32.gmra.mxu0 %v953
    %v1032 = vpop.f32.mrf.mxu0
    %v1033 = vadd.f32 %v950, %v1032
    %1034 = vdwg.mxu0
    %v1035 = vld [vmem:[#allocation4] sm:$0xff]
    %v1036 = vld [vmem:[#allocation4 + $0x8] sm:$0xff]
    %v1037 = vadd.f32 %v973, %v1035
    %v1038 = vadd.f32 %v993, %v1036
    %v1039 = vmax.f32 %v1037, 0.0
    %v1040 = vmax.f32 %v1038, 0.0
    %1041 = vst [vmem:[#allocation7] sm:$0xff] %v1039
    %1042 = vst [vmem:[#allocation7 + $0x8] sm:$0xff] %v1040
    %v1043 = vld [vmem:[%s256] sm:$0xff]
    %v1044 = vld [vmem:[%s256 + $0x8] sm:$0xff]
    %v1045 = vadd.f32 %v1013, %v1043
    %v1046 = vadd.f32 %v1033, %v1044
    %v1047 = vmax.f32 %v1045, 0.0
    %v1048 = vmax.f32 %v1046, 0.0
    %s1049 = scalar_lea.vmem [#allocation7], 16
    %1050 = vst [vmem:[%s1049] sm:$0xff] %v1047
    %1051 = vst [vmem:[%s1049 + $0x8] sm:$0xff] %v1048
    // Predicated region
    $region26: #{tpu_custom_call.1} parent=1 // pred_check
      _
    $region27: #{tpu_custom_call.1} parent=1 // pred_check_branch
      %1053 = sbr.rel (0) target = $region29
    $region28: #{tpu_custom_call.1} parent=1 // pred_region
      %1055 = vsyncadd [#allocation6], 0
      %s1056 = sshll.u32 [#allocation7], 4
      %s1057 = int_to_ptr.vmem [resolvable:$true] %s1056
      %s1058 = sshll.u32 %s5, 4
      %s1059 = int_to_ptr.hbm [resolvable:$true] %s1058
      %1064 = dma.vmem_to_hbm [thread:$0]  %s1057, 512, %s1059, [#allocation6], 256, 256, 16
    $region29: #{tpu_custom_call.1} parent=1 // pred_fallthru
      _
    // Predicated region
    $region30: #{tpu_custom_call.1} parent=1 // pred_check
      _
    $region31: #{tpu_custom_call.1} parent=1 // pred_check_branch
      %1066 = sbr.rel (0) target = $region33
    $region32: #{tpu_custom_call.1} parent=1 // pred_region
      %1068 = dma.done [#allocation6], 512
    $region33: #{tpu_custom_call.1} parent=1 // pred_fallthru
      _
    %1069 = vsyncpa [#allocation5], 1
    %1070 = vsyncpa [#allocation6], 1

</llo_original>
